<compile_context>
chip_gen: v7x
topology: tpu7x:2x2x1
jax: 0.10.0
libtpu: 0.0.40
codegen_flags: <defaults>
</compile_context>

<pallas_src>
import functools

import jax
import jax.numpy as jnp
from jax.experimental import pallas as pl
from jax.experimental.pallas import tpu as pltpu


def _round_up(x, m):
    return ((x + m - 1) // m) * m


def _vmem_limit_bytes():
    # ~3/4 of physical VMEM, capped at 100 MiB (v5e/v6e: 96 MiB, v7x: 48 MiB).
    try:
        cap = pltpu.get_tpu_info().vmem_capacity_bytes
    except Exception:
        cap = 64 * 1024 * 1024
    return int(min(cap * 3 // 4, 100 * 1024 * 1024))


# ---------------------------------------------------------------------------
# Fused single-stage kernel (one batch element per grid step)
# ---------------------------------------------------------------------------
def _stage_kernel(*refs, dilations, ksize, pre_softmax, pad_lo, pad_hi,
                  num_classes):
    """Full SingleStageModel forward for one batch element.

    pre_softmax=True (later stages):
      refs = (x, m, w_in, b_in, wd, bd, w1, b1, w_out, b_out, o, pad_scratch)
      x: (1, T, nc_pad) bf16 previous-stage logits (128-lane padded).
    pre_softmax=False (stage 1):
      refs = (x, m, wd, bd, w1, b1, w_out, b_out, o, pad_scratch)
      x: (1, T, C) f32 already-projected feature embedding.
    """
    if pre_softmax:
        (x_ref, m_ref, w_in_ref, b_in_ref, wd_ref, bd_ref,
         w1_ref, b1_ref, w_out_ref, b_out_ref, o_ref, pad_ref) = refs
    else:
        (x_ref, m_ref, wd_ref, bd_ref,
         w1_ref, b1_ref, w_out_ref, b_out_ref, o_ref, pad_ref) = refs

    T = x_ref.shape[1]
    C = pad_ref.shape[1]

    m = m_ref[0].astype(jnp.float32)                          # (T, 1)

    # ---- stage glue + input 1x1 conv ---------------------------------------
    if pre_softmax:
        # F.softmax(prev_logits, dim=channels) * mask[:, 0:1, :]
        x = x_ref[0].astype(jnp.float32)                      # (T, nc_pad)
        lane = jax.lax.broadcasted_iota(jnp.int32, x.shape, 1)
        x = jnp.where(lane < num_classes, x, -jnp.inf)        # exclude pad lanes
        e = jnp.exp(x - jnp.max(x, axis=-1, keepdims=True))
        inv = pl.reciprocal(jnp.sum(e, axis=-1, keepdims=True), approx=True)
        xb = (e * inv * m).astype(jnp.bfloat16)
        feat = jnp.dot(xb, w_in_ref[...],
                       preferred_element_type=jnp.float32) + b_in_ref[...]
    else:
        feat = x_ref[0].astype(jnp.float32)                   # (T, C)

    # Hoisted mask broadcast, reused by every residual layer.
    m_bc = jnp.broadcast_to(m, (T, C))

    # Zero ONLY the halo rows (live region [pad_lo, pad_lo+T) is overwritten).
    # Done every grid step (each megacore TC owns its own scratch).
    if pad_lo > 0:
        pad_ref[pl.ds(0, pad_lo), :] = jnp.zeros((pad_lo, C), jnp.float32)
    if pad_hi > 0:
        pad_ref[pl.ds(pad_lo + T, pad_hi), :] = jnp.zeros((pad_hi, C),
                                                          jnp.float32)
    pad_ref[pl.ds(pad_lo, T), :] = feat

    # ---- DilatedResidualLayers (statically unrolled) ------------------------
    for l, d in enumerate(dilations):
        pad_l = ((ksize - 1) * d) // 2                        # PyTorch padding
        xcur = pad_ref[pl.ds(pad_lo, T), :]                   # (T, C) f32
        acc = None
        for k in range(ksize):
            tap = pad_ref[pl.ds(pad_lo - pad_l + k * d, T), :].astype(
                jnp.bfloat16)
            p = jnp.dot(tap, wd_ref[l * ksize + k],
                        preferred_element_type=jnp.float32)
            acc = p if acc is None else acc + p
        h = jnp.maximum(acc + bd_ref[l], 0.0)                 # F.relu
        y = jnp.dot(h.astype(jnp.bfloat16), w1_ref[l],
                    preferred_element_type=jnp.float32) + b1_ref[l]
        # nn.Dropout (self.norm) is identity in eval mode.
        pad_ref[pl.ds(pad_lo, T), :] = (xcur + y) * m_bc

    # ---- conv_out * mask (lane-dense, 128-padded classes) -------------------
    feat = pad_ref[pl.ds(pad_lo, T), :]
    out = jnp.dot(feat.astype(jnp.bfloat16), w_out_ref[...],
                  preferred_element_type=jnp.float32) + b_out_ref[...]
    o_ref[0] = (out * m).astype(o_ref.dtype)


# ---------------------------------------------------------------------------
# pallas_call wrapper (grid over the batch dimension)
# ---------------------------------------------------------------------------
def _stage_call(x, m, pk, *, dilations, ksize, pre_softmax, num_classes,
                nc_pad, num_f_maps):
    N, T, cin = x.shape
    C = num_f_maps

    halo_lo = max(((ksize - 1) * d) // 2 for d in dilations)
    halo_hi = max((ksize - 1) * d - ((ksize - 1) * d) // 2 for d in dilations)
    pad_lo = _round_up(halo_lo, 8) if halo_lo > 0 else 0   # sublane-aligned live region
    pad_hi = _round_up(halo_hi, 8) if halo_hi > 0 else 0

    if pre_softmax:
        weights = [pk['w_in'], pk['b_in'], pk['wd'], pk['bd'],
                   pk['w1'], pk['b1'], pk['w_out'], pk['b_out']]
    else:
        weights = [pk['wd'], pk['bd'], pk['w1'], pk['b1'],
                   pk['w_out'], pk['b_out']]

    def full_spec(w):
        return pl.BlockSpec(w.shape, lambda n, _nd=w.ndim: (0,) * _nd)

    kernel = functools.partial(
        _stage_kernel, dilations=tuple(dilations), ksize=ksize,
        pre_softmax=pre_softmax, pad_lo=pad_lo, pad_hi=pad_hi,
        num_classes=num_classes)

    return pl.pallas_call(
        kernel,
        out_shape=jax.ShapeDtypeStruct((N, T, nc_pad), jnp.bfloat16),
        grid_spec=pltpu.PrefetchScalarGridSpec(
            num_scalar_prefetch=0,
            grid=(N,),
            in_specs=[pl.BlockSpec((1, T, cin), lambda n: (n, 0, 0)),
                      pl.BlockSpec((1, T, 1), lambda n: (n, 0, 0))]
                     + [full_spec(w) for w in weights],
            out_specs=pl.BlockSpec((1, T, nc_pad), lambda n: (n, 0, 0)),
            scratch_shapes=[pltpu.VMEM((pad_lo + T + pad_hi, C), jnp.float32)]),
        compiler_params=pltpu.CompilerParams(
            dimension_semantics=("parallel",),
            vmem_limit_bytes=_vmem_limit_bytes()),
    )(x, m, *weights)


# ---------------------------------------------------------------------------
# Parameter packing (host side)
# ---------------------------------------------------------------------------
def _pack_stage(sp, ksize, nc_pad, first_stage):
    C = sp['w_in'].shape[1]
    num_classes = sp['w_out'].shape[1]
    # Dilated-conv taps stacked along the leading axis: (L*ksize, C, C).
    wd = jnp.concatenate([w for (w, _, _, _) in sp['layers']], axis=0)
    bd = jnp.stack([b for (_, b, _, _) in sp['layers']])          # (L, 1, C)
    w1 = jnp.stack([w for (_, _, w, _) in sp['layers']])          # (L, C, C)
    b1 = jnp.stack([b for (_, _, _, b) in sp['layers']])          # (L, 1, C)
    # Lane-dense (128-padded) output projection; padded class lanes stay zero.
    w_out = jnp.zeros((C, nc_pad), jnp.float32).at[:, :num_classes].set(
        sp['w_out'])
    b_out = jnp.zeros((1, nc_pad), jnp.float32).at[:, :num_classes].set(
        sp['b_out'])
    pk = {
        'wd': wd.astype(jnp.bfloat16),
        'bd': bd.astype(jnp.float32),
        'w1': w1.astype(jnp.bfloat16),
        'b1': b1.astype(jnp.float32),
        'w_out': w_out.astype(jnp.bfloat16),
        'b_out': b_out,
    }
    if not first_stage:
        # Input 1x1 conv consumes the 128-padded logits; padded rows are zero.
        w_in = jnp.zeros((nc_pad, C), jnp.float32).at[:num_classes, :].set(
            sp['w_in'])
        pk['w_in'] = w_in.astype(jnp.bfloat16)
        pk['b_in'] = sp['b_in'].astype(jnp.float32)
    return pk


# ---------------------------------------------------------------------------
# Model (plain-JAX glue orchestrating one fused Pallas kernel per stage)
# ---------------------------------------------------------------------------
def _dilations(num_layers, exponential_boundary, deta_dilation):
    ds = []
    for i in range(num_layers):
        if i <= exponential_boundary:
            ds.append(2 ** i)
        else:
            ds.append(2 ** exponential_boundary + i * deta_dilation)
    return ds


def phase_change_forward(x_nct, mask_nct, params, *, sample_rate, kernel_size,
                         dilations):
    # mask = mask[:, :, ::sample_rate]; only channel 0 is ever used.
    mask = mask_nct[:, :, ::sample_rate]
    m = jnp.transpose(mask[:, 0:1, :], (0, 2, 1)).astype(jnp.float32)   # (N,T,1)
    x = jnp.transpose(x_nct, (0, 2, 1))                                 # (N,T,D)

    num_classes = params['stage1']['w_out'].shape[1]
    num_f_maps = params['stage1']['w_in'].shape[1]
    nc_pad = _round_up(max(num_classes, 128), 128)

    # Stage-1 conv_1x1 input projection (dim -> num_f_maps) as a plain XLA dot
    # outside the fused kernel (proper MXU tiling for the wide contraction).
    w_in1 = params['stage1']['w_in'].astype(jnp.bfloat16)
    b_in1 = params['stage1']['b_in'].astype(jnp.float32)
    feat1 = jnp.dot(x.astype(jnp.bfloat16), w_in1,
                    preferred_element_type=jnp.float32) + b_in1          # (N,T,C)

    pk1 = _pack_stage(params['stage1'], kernel_size, nc_pad, first_stage=True)
    pks = [_pack_stage(sp, kernel_size, nc_pad, first_stage=False)
           for sp in params['stages']]

    out = _stage_call(feat1, m, pk1, dilations=dilations, ksize=kernel_size,
                      pre_softmax=False, num_classes=num_classes,
                      nc_pad=nc_pad, num_f_maps=num_f_maps)
    outs = [out]
    for pk in pks:
        out = _stage_call(out, m, pk, dilations=dilations, ksize=kernel_size,
                          pre_softmax=True, num_classes=num_classes,
                          nc_pad=nc_pad, num_f_maps=num_f_maps)
        outs.append(out)

    outputs = jnp.stack(outs, axis=0)                       # (S,N,T,nc_pad) bf16
    outputs = outputs[..., :num_classes].astype(jnp.float32)
    outputs = jnp.transpose(outputs, (0, 1, 3, 2))          # (S, N, nc, T)
    # F.interpolate(..., scale_factor=[1, sample_rate], mode='nearest')
    outputs = jnp.repeat(outputs, sample_rate, axis=-1)
    return outputs


# ---------------------------------------------------------------------------
# Deterministic parameter init
# ---------------------------------------------------------------------------
def _init_stage(key, in_dim, num_f_maps, num_classes, num_layers, ksize):
    keys = jax.random.split(key, 4 + 4 * num_layers)
    s = 0.1
    p = {
        'w_in': s * jax.random.normal(keys[0], (in_dim, num_f_maps), jnp.float32),
        'b_in': s * jax.random.normal(keys[1], (1, num_f_maps), jnp.float32),
        'w_out': s * jax.random.normal(keys[2], (num_f_maps, num_classes), jnp.float32),
        'b_out': s * jax.random.normal(keys[3], (1, num_classes), jnp.float32),
        'layers': [],
    }
    for i in range(num_layers):
        k0, k1, k2, k3 = keys[4 + 4 * i: 8 + 4 * i]
        p['layers'].append((
            s * jax.random.normal(k0, (ksize, num_f_maps, num_f_maps), jnp.float32),
            s * jax.random.normal(k1, (1, num_f_maps), jnp.float32),
            s * jax.random.normal(k2, (num_f_maps, num_f_maps), jnp.float32),
            s * jax.random.normal(k3, (1, num_f_maps), jnp.float32),
        ))
    return p


def init_phase_change_params(key, *, num_stages, num_layers, num_f_maps, dim,
                             num_classes, kernel_size):
    keys = jax.random.split(key, num_stages)
    params = {
        'stage1': _init_stage(keys[0], dim, num_f_maps, num_classes,
                              num_layers, kernel_size),
        'stages': [_init_stage(keys[s], num_classes, num_f_maps, num_classes,
                               num_layers, kernel_size)
                   for s in range(1, num_stages)],
    }
    return params


# ---------------------------------------------------------------------------
if __name__ == "__main__":
    # Small config consistent with the PyTorch module defaults.
    num_stages = 2
    num_layers = 3
    num_f_maps = 16
    dim = 8
    num_classes = 8
    kernel_size = 3
    sample_rate = 1
    exponential_boundary = 100
    deta_dilation = 0

    N, T = 2, 16

    key = jax.random.PRNGKey(0)
    kx, km, kp = jax.random.split(key, 3)

    x = jax.random.normal(kx, (N, dim, T), jnp.float32)               # NCT
    mask = (jax.random.uniform(km, (N, num_classes, T)) > 0.2).astype(jnp.float32)

    params = init_phase_change_params(
        kp, num_stages=num_stages, num_layers=num_layers,
        num_f_maps=num_f_maps, dim=dim, num_classes=num_classes,
        kernel_size=kernel_size)

    dilations = _dilations(num_layers, exponential_boundary, deta_dilation)

    out = phase_change_forward(x, mask, params, sample_rate=sample_rate,
                               kernel_size=kernel_size, dilations=dilations)
    out = jax.block_until_ready(out)

    expected_shape = (num_stages, N, num_classes, T * sample_rate)
    assert out.shape == expected_shape, (out.shape, expected_shape)
    assert jnp.all(jnp.isfinite(out))
    print("KERNEL_OK")
</pallas_src>

<mosaic_0001>
module attributes {stable_mosaic.version = 11 : i64} {
  func.func @_stage_kernel(%arg0: i32, %arg1: memref<1x16x16xf32, #tpu.memory_space<vmem>>, %arg2: memref<1x16x1xf32, #tpu.memory_space<vmem>>, %arg3: memref<9x16x16xbf16, #tpu.memory_space<vmem>>, %arg4: memref<3x1x16xf32, #tpu.memory_space<vmem>>, %arg5: memref<3x16x16xbf16, #tpu.memory_space<vmem>>, %arg6: memref<3x1x16xf32, #tpu.memory_space<vmem>>, %arg7: memref<16x128xbf16, #tpu.memory_space<vmem>>, %arg8: memref<1x128xf32, #tpu.memory_space<vmem>>, %arg9: memref<1x16x128xbf16, #tpu.memory_space<vmem>>, %arg10: memref<32x16xf32, #tpu.memory_space<vmem>>) attributes {dimension_semantics = [#tpu.dimension_semantics<parallel>], iteration_bounds = array<i64: 2>, scalar_prefetch = 0 : i64, scratch_operands = 1 : i64, tpu.core_type = #tpu.core_type<tc>, window_params = [{transform_indices = @transform_0, window_bounds = array<i64: 1, 16, 16>}, {transform_indices = @transform_1, window_bounds = array<i64: 1, 16, 1>}, {pipeline_mode = #tpu.pipeline_mode<synchronous>, transform_indices = @transform_2, window_bounds = array<i64: 9, 16, 16>}, {pipeline_mode = #tpu.pipeline_mode<synchronous>, transform_indices = @transform_3, window_bounds = array<i64: 3, 1, 16>}, {pipeline_mode = #tpu.pipeline_mode<synchronous>, transform_indices = @transform_4, window_bounds = array<i64: 3, 16, 16>}, {pipeline_mode = #tpu.pipeline_mode<synchronous>, transform_indices = @transform_5, window_bounds = array<i64: 3, 1, 16>}, {pipeline_mode = #tpu.pipeline_mode<synchronous>, transform_indices = @transform_6, window_bounds = array<i64: 16, 128>}, {pipeline_mode = #tpu.pipeline_mode<synchronous>, transform_indices = @transform_7, window_bounds = array<i64: 1, 128>}, {transform_indices = @transform_8, window_bounds = array<i64: 1, 16, 128>}]} {
    %c0 = arith.constant 0 : index
    %c0_0 = arith.constant 0 : index
    %c0_1 = arith.constant 0 : index
    %0 = vector.load %arg2[%c0, %c0_0, %c0_1] : memref<1x16x1xf32, #tpu.memory_space<vmem>>, vector<1x16x1xf32>
    %1 = vector.shape_cast %0 : vector<1x16x1xf32> to vector<16x1xf32>
    %c0_2 = arith.constant 0 : index
    %c0_3 = arith.constant 0 : index
    %c0_4 = arith.constant 0 : index
    %2 = vector.load %arg1[%c0_2, %c0_3, %c0_4] : memref<1x16x16xf32, #tpu.memory_space<vmem>>, vector<1x16x16xf32>
    %3 = vector.shape_cast %2 : vector<1x16x16xf32> to vector<16x16xf32>
    %4 = vector.shape_cast %1 : vector<16x1xf32> to vector<16x1xf32>
    %5 = vector.broadcast %4 : vector<16x1xf32> to vector<16x16xf32>
    %cst = arith.constant 0.000000e+00 : f32
    %6 = vector.broadcast %cst : f32 to vector<8x16xf32>
    %c0_5 = arith.constant 0 : index
    %c0_6 = arith.constant 0 : index
    %7 = vector.load %arg10[%c0_5, %c0_6] : memref<32x16xf32, #tpu.memory_space<vmem>>, vector<8x16xf32>
    tpu.vector_store %arg10[%c0_5, %c0_6], %6 {strides = array<i32>} : memref<32x16xf32, #tpu.memory_space<vmem>>, vector<8x16xf32>,
    %cst_7 = arith.constant 0.000000e+00 : f32
    %8 = vector.broadcast %cst_7 : f32 to vector<8x16xf32>
    %c24 = arith.constant 24 : index
    %c0_8 = arith.constant 0 : index
    %9 = vector.load %arg10[%c24, %c0_8] : memref<32x16xf32, #tpu.memory_space<vmem>>, vector<8x16xf32>
    tpu.vector_store %arg10[%c24, %c0_8], %8 {strides = array<i32>} : memref<32x16xf32, #tpu.memory_space<vmem>>, vector<8x16xf32>,
    %c8 = arith.constant 8 : index
    %c0_9 = arith.constant 0 : index
    %10 = vector.load %arg10[%c8, %c0_9] : memref<32x16xf32, #tpu.memory_space<vmem>>, vector<16x16xf32>
    tpu.vector_store %arg10[%c8, %c0_9], %3 {strides = array<i32>} : memref<32x16xf32, #tpu.memory_space<vmem>>, vector<16x16xf32>,
    %c8_10 = arith.constant 8 : index
    %c0_11 = arith.constant 0 : index
    %11 = vector.load %arg10[%c8_10, %c0_11] : memref<32x16xf32, #tpu.memory_space<vmem>>, vector<16x16xf32>
    %c7 = arith.constant 7 : index
    %c0_12 = arith.constant 0 : index
    %12 = vector.load %arg10[%c7, %c0_12] : memref<32x16xf32, #tpu.memory_space<vmem>>, vector<16x16xf32>
    %13 = arith.truncf %12 : vector<16x16xf32> to vector<16x16xbf16>
    %c0_13 = arith.constant 0 : index
    %c0_14 = arith.constant 0 : index
    %c0_15 = arith.constant 0 : index
    %14 = vector.load %arg3[%c0_13, %c0_14, %c0_15] : memref<9x16x16xbf16, #tpu.memory_space<vmem>>, vector<1x16x16xbf16>
    %15 = vector.shape_cast %14 : vector<1x16x16xbf16> to vector<16x16xbf16>
    %cst_16 = arith.constant dense<0.000000e+00> : vector<16x16xf32>
    %16 = tpu.matmul %13, %15, %cst_16 {dimension_numbers = #tpu.dot_dimension_numbers<[1], [0], [0], [1], [0, 0, 1, 1], [], []>} : vector<16x16xbf16>, vector<16x16xbf16>, vector<16x16xf32> -> vector<16x16xf32>
    %c8_17 = arith.constant 8 : index
    %c0_18 = arith.constant 0 : index
    %17 = vector.load %arg10[%c8_17, %c0_18] : memref<32x16xf32, #tpu.memory_space<vmem>>, vector<16x16xf32>
    %18 = arith.truncf %17 : vector<16x16xf32> to vector<16x16xbf16>
    %c1 = arith.constant 1 : index
    %c0_19 = arith.constant 0 : index
    %c0_20 = arith.constant 0 : index
    %19 = vector.load %arg3[%c1, %c0_19, %c0_20] : memref<9x16x16xbf16, #tpu.memory_space<vmem>>, vector<1x16x16xbf16>
    %20 = vector.shape_cast %19 : vector<1x16x16xbf16> to vector<16x16xbf16>
    %cst_21 = arith.constant dense<0.000000e+00> : vector<16x16xf32>
    %21 = tpu.matmul %18, %20, %cst_21 {dimension_numbers = #tpu.dot_dimension_numbers<[1], [0], [0], [1], [0, 0, 1, 1], [], []>} : vector<16x16xbf16>, vector<16x16xbf16>, vector<16x16xf32> -> vector<16x16xf32>
    %22 = arith.addf %16, %21 : vector<16x16xf32>
    %c9 = arith.constant 9 : index
    %c0_22 = arith.constant 0 : index
    %23 = vector.load %arg10[%c9, %c0_22] : memref<32x16xf32, #tpu.memory_space<vmem>>, vector<16x16xf32>
    %24 = arith.truncf %23 : vector<16x16xf32> to vector<16x16xbf16>
    %c2 = arith.constant 2 : index
    %c0_23 = arith.constant 0 : index
    %c0_24 = arith.constant 0 : index
    %25 = vector.load %arg3[%c2, %c0_23, %c0_24] : memref<9x16x16xbf16, #tpu.memory_space<vmem>>, vector<1x16x16xbf16>
    %26 = vector.shape_cast %25 : vector<1x16x16xbf16> to vector<16x16xbf16>
    %cst_25 = arith.constant dense<0.000000e+00> : vector<16x16xf32>
    %27 = tpu.matmul %24, %26, %cst_25 {dimension_numbers = #tpu.dot_dimension_numbers<[1], [0], [0], [1], [0, 0, 1, 1], [], []>} : vector<16x16xbf16>, vector<16x16xbf16>, vector<16x16xf32> -> vector<16x16xf32>
    %28 = arith.addf %22, %27 : vector<16x16xf32>
    %c0_26 = arith.constant 0 : index
    %c0_27 = arith.constant 0 : index
    %c0_28 = arith.constant 0 : index
    %29 = vector.load %arg4[%c0_26, %c0_27, %c0_28] : memref<3x1x16xf32, #tpu.memory_space<vmem>>, vector<1x1x16xf32>
    %30 = vector.shape_cast %29 : vector<1x1x16xf32> to vector<1x16xf32>
    %31 = vector.broadcast %30 : vector<1x16xf32> to vector<16x16xf32>
    %32 = arith.addf %28, %31 : vector<16x16xf32>
    %cst_29 = arith.constant 0.000000e+00 : f32
    %33 = vector.broadcast %cst_29 : f32 to vector<16x16xf32>
    %34 = arith.maximumf %32, %33 : vector<16x16xf32>
    %35 = arith.truncf %34 : vector<16x16xf32> to vector<16x16xbf16>
    %c0_30 = arith.constant 0 : index
    %c0_31 = arith.constant 0 : index
    %c0_32 = arith.constant 0 : index
    %36 = vector.load %arg5[%c0_30, %c0_31, %c0_32] : memref<3x16x16xbf16, #tpu.memory_space<vmem>>, vector<1x16x16xbf16>
    %37 = vector.shape_cast %36 : vector<1x16x16xbf16> to vector<16x16xbf16>
    %cst_33 = arith.constant dense<0.000000e+00> : vector<16x16xf32>
    %38 = tpu.matmul %35, %37, %cst_33 {dimension_numbers = #tpu.dot_dimension_numbers<[1], [0], [0], [1], [0, 0, 1, 1], [], []>} : vector<16x16xbf16>, vector<16x16xbf16>, vector<16x16xf32> -> vector<16x16xf32>
    %c0_34 = arith.constant 0 : index
    %c0_35 = arith.constant 0 : index
    %c0_36 = arith.constant 0 : index
    %39 = vector.load %arg6[%c0_34, %c0_35, %c0_36] : memref<3x1x16xf32, #tpu.memory_space<vmem>>, vector<1x1x16xf32>
    %40 = vector.shape_cast %39 : vector<1x1x16xf32> to vector<1x16xf32>
    %41 = vector.broadcast %40 : vector<1x16xf32> to vector<16x16xf32>
    %42 = arith.addf %38, %41 : vector<16x16xf32>
    %43 = arith.addf %11, %42 : vector<16x16xf32>
    %44 = arith.mulf %43, %5 : vector<16x16xf32>
    %c8_37 = arith.constant 8 : index
    %c0_38 = arith.constant 0 : index
    %45 = vector.load %arg10[%c8_37, %c0_38] : memref<32x16xf32, #tpu.memory_space<vmem>>, vector<16x16xf32>
    tpu.vector_store %arg10[%c8_37, %c0_38], %44 {strides = array<i32>} : memref<32x16xf32, #tpu.memory_space<vmem>>, vector<16x16xf32>,
    %c8_39 = arith.constant 8 : index
    %c0_40 = arith.constant 0 : index
    %46 = vector.load %arg10[%c8_39, %c0_40] : memref<32x16xf32, #tpu.memory_space<vmem>>, vector<16x16xf32>
    %c6 = arith.constant 6 : index
    %c0_41 = arith.constant 0 : index
    %47 = vector.load %arg10[%c6, %c0_41] : memref<32x16xf32, #tpu.memory_space<vmem>>, vector<16x16xf32>
    %48 = arith.truncf %47 : vector<16x16xf32> to vector<16x16xbf16>
    %c3 = arith.constant 3 : index
    %c0_42 = arith.constant 0 : index
    %c0_43 = arith.constant 0 : index
    %49 = vector.load %arg3[%c3, %c0_42, %c0_43] : memref<9x16x16xbf16, #tpu.memory_space<vmem>>, vector<1x16x16xbf16>
    %50 = vector.shape_cast %49 : vector<1x16x16xbf16> to vector<16x16xbf16>
    %cst_44 = arith.constant dense<0.000000e+00> : vector<16x16xf32>
    %51 = tpu.matmul %48, %50, %cst_44 {dimension_numbers = #tpu.dot_dimension_numbers<[1], [0], [0], [1], [0, 0, 1, 1], [], []>} : vector<16x16xbf16>, vector<16x16xbf16>, vector<16x16xf32> -> vector<16x16xf32>
    %c8_45 = arith.constant 8 : index
    %c0_46 = arith.constant 0 : index
    %52 = vector.load %arg10[%c8_45, %c0_46] : memref<32x16xf32, #tpu.memory_space<vmem>>, vector<16x16xf32>
    %53 = arith.truncf %52 : vector<16x16xf32> to vector<16x16xbf16>
    %c4 = arith.constant 4 : index
    %c0_47 = arith.constant 0 : index
    %c0_48 = arith.constant 0 : index
    %54 = vector.load %arg3[%c4, %c0_47, %c0_48] : memref<9x16x16xbf16, #tpu.memory_space<vmem>>, vector<1x16x16xbf16>
    %55 = vector.shape_cast %54 : vector<1x16x16xbf16> to vector<16x16xbf16>
    %cst_49 = arith.constant dense<0.000000e+00> : vector<16x16xf32>
    %56 = tpu.matmul %53, %55, %cst_49 {dimension_numbers = #tpu.dot_dimension_numbers<[1], [0], [0], [1], [0, 0, 1, 1], [], []>} : vector<16x16xbf16>, vector<16x16xbf16>, vector<16x16xf32> -> vector<16x16xf32>
    %57 = arith.addf %51, %56 : vector<16x16xf32>
    %c10 = arith.constant 10 : index
    %c0_50 = arith.constant 0 : index
    %58 = vector.load %arg10[%c10, %c0_50] : memref<32x16xf32, #tpu.memory_space<vmem>>, vector<16x16xf32>
    %59 = arith.truncf %58 : vector<16x16xf32> to vector<16x16xbf16>
    %c5 = arith.constant 5 : index
    %c0_51 = arith.constant 0 : index
    %c0_52 = arith.constant 0 : index
    %60 = vector.load %arg3[%c5, %c0_51, %c0_52] : memref<9x16x16xbf16, #tpu.memory_space<vmem>>, vector<1x16x16xbf16>
    %61 = vector.shape_cast %60 : vector<1x16x16xbf16> to vector<16x16xbf16>
    %cst_53 = arith.constant dense<0.000000e+00> : vector<16x16xf32>
    %62 = tpu.matmul %59, %61, %cst_53 {dimension_numbers = #tpu.dot_dimension_numbers<[1], [0], [0], [1], [0, 0, 1, 1], [], []>} : vector<16x16xbf16>, vector<16x16xbf16>, vector<16x16xf32> -> vector<16x16xf32>
    %63 = arith.addf %57, %62 : vector<16x16xf32>
    %c1_54 = arith.constant 1 : index
    %c0_55 = arith.constant 0 : index
    %c0_56 = arith.constant 0 : index
    %64 = vector.load %arg4[%c1_54, %c0_55, %c0_56] : memref<3x1x16xf32, #tpu.memory_space<vmem>>, vector<1x1x16xf32>
    %65 = vector.shape_cast %64 : vector<1x1x16xf32> to vector<1x16xf32>
    %66 = vector.broadcast %65 : vector<1x16xf32> to vector<16x16xf32>
    %67 = arith.addf %63, %66 : vector<16x16xf32>
    %cst_57 = arith.constant 0.000000e+00 : f32
    %68 = vector.broadcast %cst_57 : f32 to vector<16x16xf32>
    %69 = arith.maximumf %67, %68 : vector<16x16xf32>
    %70 = arith.truncf %69 : vector<16x16xf32> to vector<16x16xbf16>
    %c1_58 = arith.constant 1 : index
    %c0_59 = arith.constant 0 : index
    %c0_60 = arith.constant 0 : index
    %71 = vector.load %arg5[%c1_58, %c0_59, %c0_60] : memref<3x16x16xbf16, #tpu.memory_space<vmem>>, vector<1x16x16xbf16>
    %72 = vector.shape_cast %71 : vector<1x16x16xbf16> to vector<16x16xbf16>
    %cst_61 = arith.constant dense<0.000000e+00> : vector<16x16xf32>
    %73 = tpu.matmul %70, %72, %cst_61 {dimension_numbers = #tpu.dot_dimension_numbers<[1], [0], [0], [1], [0, 0, 1, 1], [], []>} : vector<16x16xbf16>, vector<16x16xbf16>, vector<16x16xf32> -> vector<16x16xf32>
    %c1_62 = arith.constant 1 : index
    %c0_63 = arith.constant 0 : index
    %c0_64 = arith.constant 0 : index
    %74 = vector.load %arg6[%c1_62, %c0_63, %c0_64] : memref<3x1x16xf32, #tpu.memory_space<vmem>>, vector<1x1x16xf32>
    %75 = vector.shape_cast %74 : vector<1x1x16xf32> to vector<1x16xf32>
    %76 = vector.broadcast %75 : vector<1x16xf32> to vector<16x16xf32>
    %77 = arith.addf %73, %76 : vector<16x16xf32>
    %78 = arith.addf %46, %77 : vector<16x16xf32>
    %79 = arith.mulf %78, %5 : vector<16x16xf32>
    %c8_65 = arith.constant 8 : index
    %c0_66 = arith.constant 0 : index
    %80 = vector.load %arg10[%c8_65, %c0_66] : memref<32x16xf32, #tpu.memory_space<vmem>>, vector<16x16xf32>
    tpu.vector_store %arg10[%c8_65, %c0_66], %79 {strides = array<i32>} : memref<32x16xf32, #tpu.memory_space<vmem>>, vector<16x16xf32>,
    %c8_67 = arith.constant 8 : index
    %c0_68 = arith.constant 0 : index
    %81 = vector.load %arg10[%c8_67, %c0_68] : memref<32x16xf32, #tpu.memory_space<vmem>>, vector<16x16xf32>
    %c4_69 = arith.constant 4 : index
    %c0_70 = arith.constant 0 : index
    %82 = vector.load %arg10[%c4_69, %c0_70] : memref<32x16xf32, #tpu.memory_space<vmem>>, vector<16x16xf32>
    %83 = arith.truncf %82 : vector<16x16xf32> to vector<16x16xbf16>
    %c6_71 = arith.constant 6 : index
    %c0_72 = arith.constant 0 : index
    %c0_73 = arith.constant 0 : index
    %84 = vector.load %arg3[%c6_71, %c0_72, %c0_73] : memref<9x16x16xbf16, #tpu.memory_space<vmem>>, vector<1x16x16xbf16>
    %85 = vector.shape_cast %84 : vector<1x16x16xbf16> to vector<16x16xbf16>
    %cst_74 = arith.constant dense<0.000000e+00> : vector<16x16xf32>
    %86 = tpu.matmul %83, %85, %cst_74 {dimension_numbers = #tpu.dot_dimension_numbers<[1], [0], [0], [1], [0, 0, 1, 1], [], []>} : vector<16x16xbf16>, vector<16x16xbf16>, vector<16x16xf32> -> vector<16x16xf32>
    %c8_75 = arith.constant 8 : index
    %c0_76 = arith.constant 0 : index
    %87 = vector.load %arg10[%c8_75, %c0_76] : memref<32x16xf32, #tpu.memory_space<vmem>>, vector<16x16xf32>
    %88 = arith.truncf %87 : vector<16x16xf32> to vector<16x16xbf16>
    %c7_77 = arith.constant 7 : index
    %c0_78 = arith.constant 0 : index
    %c0_79 = arith.constant 0 : index
    %89 = vector.load %arg3[%c7_77, %c0_78, %c0_79] : memref<9x16x16xbf16, #tpu.memory_space<vmem>>, vector<1x16x16xbf16>
    %90 = vector.shape_cast %89 : vector<1x16x16xbf16> to vector<16x16xbf16>
    %cst_80 = arith.constant dense<0.000000e+00> : vector<16x16xf32>
    %91 = tpu.matmul %88, %90, %cst_80 {dimension_numbers = #tpu.dot_dimension_numbers<[1], [0], [0], [1], [0, 0, 1, 1], [], []>} : vector<16x16xbf16>, vector<16x16xbf16>, vector<16x16xf32> -> vector<16x16xf32>
    %92 = arith.addf %86, %91 : vector<16x16xf32>
    %c12 = arith.constant 12 : index
    %c0_81 = arith.constant 0 : index
    %93 = vector.load %arg10[%c12, %c0_81] : memref<32x16xf32, #tpu.memory_space<vmem>>, vector<16x16xf32>
    %94 = arith.truncf %93 : vector<16x16xf32> to vector<16x16xbf16>
    %c8_82 = arith.constant 8 : index
    %c0_83 = arith.constant 0 : index
    %c0_84 = arith.constant 0 : index
    %95 = vector.load %arg3[%c8_82, %c0_83, %c0_84] : memref<9x16x16xbf16, #tpu.memory_space<vmem>>, vector<1x16x16xbf16>
    %96 = vector.shape_cast %95 : vector<1x16x16xbf16> to vector<16x16xbf16>
    %cst_85 = arith.constant dense<0.000000e+00> : vector<16x16xf32>
    %97 = tpu.matmul %94, %96, %cst_85 {dimension_numbers = #tpu.dot_dimension_numbers<[1], [0], [0], [1], [0, 0, 1, 1], [], []>} : vector<16x16xbf16>, vector<16x16xbf16>, vector<16x16xf32> -> vector<16x16xf32>
    %98 = arith.addf %92, %97 : vector<16x16xf32>
    %c2_86 = arith.constant 2 : index
    %c0_87 = arith.constant 0 : index
    %c0_88 = arith.constant 0 : index
    %99 = vector.load %arg4[%c2_86, %c0_87, %c0_88] : memref<3x1x16xf32, #tpu.memory_space<vmem>>, vector<1x1x16xf32>
    %100 = vector.shape_cast %99 : vector<1x1x16xf32> to vector<1x16xf32>
    %101 = vector.broadcast %100 : vector<1x16xf32> to vector<16x16xf32>
    %102 = arith.addf %98, %101 : vector<16x16xf32>
    %cst_89 = arith.constant 0.000000e+00 : f32
    %103 = vector.broadcast %cst_89 : f32 to vector<16x16xf32>
    %104 = arith.maximumf %102, %103 : vector<16x16xf32>
    %105 = arith.truncf %104 : vector<16x16xf32> to vector<16x16xbf16>
    %c2_90 = arith.constant 2 : index
    %c0_91 = arith.constant 0 : index
    %c0_92 = arith.constant 0 : index
    %106 = vector.load %arg5[%c2_90, %c0_91, %c0_92] : memref<3x16x16xbf16, #tpu.memory_space<vmem>>, vector<1x16x16xbf16>
    %107 = vector.shape_cast %106 : vector<1x16x16xbf16> to vector<16x16xbf16>
    %cst_93 = arith.constant dense<0.000000e+00> : vector<16x16xf32>
    %108 = tpu.matmul %105, %107, %cst_93 {dimension_numbers = #tpu.dot_dimension_numbers<[1], [0], [0], [1], [0, 0, 1, 1], [], []>} : vector<16x16xbf16>, vector<16x16xbf16>, vector<16x16xf32> -> vector<16x16xf32>
    %c2_94 = arith.constant 2 : index
    %c0_95 = arith.constant 0 : index
    %c0_96 = arith.constant 0 : index
    %109 = vector.load %arg6[%c2_94, %c0_95, %c0_96] : memref<3x1x16xf32, #tpu.memory_space<vmem>>, vector<1x1x16xf32>
    %110 = vector.shape_cast %109 : vector<1x1x16xf32> to vector<1x16xf32>
    %111 = vector.broadcast %110 : vector<1x16xf32> to vector<16x16xf32>
    %112 = arith.addf %108, %111 : vector<16x16xf32>
    %113 = arith.addf %81, %112 : vector<16x16xf32>
    %114 = arith.mulf %113, %5 : vector<16x16xf32>
    %c8_97 = arith.constant 8 : index
    %c0_98 = arith.constant 0 : index
    %115 = vector.load %arg10[%c8_97, %c0_98] : memref<32x16xf32, #tpu.memory_space<vmem>>, vector<16x16xf32>
    tpu.vector_store %arg10[%c8_97, %c0_98], %114 {strides = array<i32>} : memref<32x16xf32, #tpu.memory_space<vmem>>, vector<16x16xf32>,
    %c8_99 = arith.constant 8 : index
    %c0_100 = arith.constant 0 : index
    %116 = vector.load %arg10[%c8_99, %c0_100] : memref<32x16xf32, #tpu.memory_space<vmem>>, vector<16x16xf32>
    %117 = arith.truncf %116 : vector<16x16xf32> to vector<16x16xbf16>
    %c0_101 = arith.constant 0 : index
    %c0_102 = arith.constant 0 : index
    %118 = vector.load %arg7[%c0_101, %c0_102] : memref<16x128xbf16, #tpu.memory_space<vmem>>, vector<16x128xbf16>
    %cst_103 = arith.constant dense<0.000000e+00> : vector<16x128xf32>
    %119 = tpu.matmul %117, %118, %cst_103 {dimension_numbers = #tpu.dot_dimension_numbers<[1], [0], [0], [1], [0, 0, 1, 1], [], []>} : vector<16x16xbf16>, vector<16x128xbf16>, vector<16x128xf32> -> vector<16x128xf32>
    %c0_104 = arith.constant 0 : index
    %c0_105 = arith.constant 0 : index
    %120 = vector.load %arg8[%c0_104, %c0_105] : memref<1x128xf32, #tpu.memory_space<vmem>>, vector<1x128xf32>
    %121 = vector.broadcast %120 : vector<1x128xf32> to vector<16x128xf32>
    %122 = arith.addf %119, %121 : vector<16x128xf32>
    %123 = vector.broadcast %1 : vector<16x1xf32> to vector<16x128xf32>
    %124 = arith.mulf %122, %123 : vector<16x128xf32>
    %125 = arith.truncf %124 : vector<16x128xf32> to vector<16x128xbf16>
    %c0_106 = arith.constant 0 : index
    %c0_107 = arith.constant 0 : index
    %c0_108 = arith.constant 0 : index
    %126 = vector.load %arg9[%c0_106, %c0_107, %c0_108] : memref<1x16x128xbf16, #tpu.memory_space<vmem>>, vector<1x16x128xbf16>
    %127 = vector.shape_cast %126 : vector<1x16x128xbf16> to vector<16x128xbf16>
    %128 = vector.shape_cast %125 : vector<16x128xbf16> to vector<1x16x128xbf16>
    tpu.vector_store %arg9[%c0_106, %c0_107, %c0_108], %128 {strides = array<i32>} : memref<1x16x128xbf16, #tpu.memory_space<vmem>>, vector<1x16x128xbf16>,
    return
  }
  func.func @transform_0(%arg0: i32) -> (i32, i32, i32) {
    %c0_i32 = arith.constant 0 : i32
    %c0_i32_0 = arith.constant 0 : i32
    %c0_i32_1 = arith.constant 0 : i32
    return %arg0, %c0_i32, %c0_i32_0 : i32, i32, i32
  }
  func.func @transform_1(%arg0: i32) -> (i32, i32, i32) {
    %c0_i32 = arith.constant 0 : i32
    %c0_i32_0 = arith.constant 0 : i32
    %c0_i32_1 = arith.constant 0 : i32
    return %arg0, %c0_i32, %c0_i32_0 : i32, i32, i32
  }
  func.func @transform_2(%arg0: i32) -> (i32, i32, i32) {
    %c0_i32 = arith.constant 0 : i32
    %c0_i32_0 = arith.constant 0 : i32
    %c0_i32_1 = arith.constant 0 : i32
    %c0_i32_2 = arith.constant 0 : i32
    return %c0_i32, %c0_i32_0, %c0_i32_1 : i32, i32, i32
  }
  func.func @transform_3(%arg0: i32) -> (i32, i32, i32) {
    %c0_i32 = arith.constant 0 : i32
    %c0_i32_0 = arith.constant 0 : i32
    %c0_i32_1 = arith.constant 0 : i32
    %c0_i32_2 = arith.constant 0 : i32
    return %c0_i32, %c0_i32_0, %c0_i32_1 : i32, i32, i32
  }
  func.func @transform_4(%arg0: i32) -> (i32, i32, i32) {
    %c0_i32 = arith.constant 0 : i32
    %c0_i32_0 = arith.constant 0 : i32
    %c0_i32_1 = arith.constant 0 : i32
    %c0_i32_2 = arith.constant 0 : i32
    return %c0_i32, %c0_i32_0, %c0_i32_1 : i32, i32, i32
  }
  func.func @transform_5(%arg0: i32) -> (i32, i32, i32) {
    %c0_i32 = arith.constant 0 : i32
    %c0_i32_0 = arith.constant 0 : i32
    %c0_i32_1 = arith.constant 0 : i32
    %c0_i32_2 = arith.constant 0 : i32
    return %c0_i32, %c0_i32_0, %c0_i32_1 : i32, i32, i32
  }
  func.func @transform_6(%arg0: i32) -> (i32, i32) {
    %c0_i32 = arith.constant 0 : i32
    %c0_i32_0 = arith.constant 0 : i32
    %c0_i32_1 = arith.constant 0 : i32
    return %c0_i32, %c0_i32_0 : i32, i32
  }
  func.func @transform_7(%arg0: i32) -> (i32, i32) {
    %c0_i32 = arith.constant 0 : i32
    %c0_i32_0 = arith.constant 0 : i32
    %c0_i32_1 = arith.constant 0 : i32
    return %c0_i32, %c0_i32_0 : i32, i32
  }
  func.func @transform_8(%arg0: i32) -> (i32, i32, i32) {
    %c0_i32 = arith.constant 0 : i32
    %c0_i32_0 = arith.constant 0 : i32
    %c0_i32_1 = arith.constant 0 : i32
    return %arg0, %c0_i32, %c0_i32_0 : i32, i32, i32
  }
}

</mosaic_0001>

<llo_original>
// kernel: tpu_custom_call.1
$region0: #{tpu_custom_call.1}
  #allocation0 [shape = 'u32[]', space=smem, size = 0x4, offset = 0x4, fixed_abs, tag = 'smem constant byte address 0x4 - core index']
  #allocation1 [shape = 'u32[144,128]{1,0:T(1,128)}', space=vmem, size = 0x12000, scoped, tag = 'internal scratch']
  #allocation2 [shape = 'f32[32,16]{1,0:T(8,128)}', space=vmem, size = 0x4000, scoped, tag = 'scratch operand']
  %s0 = inlined_call_operand.vmem [shape: f32[2,16,16], index: 0, kind: input, shape index: {}]
  %s1 = inlined_call_operand.vmem [shape: f32[2,16,1], index: 1, kind: input, shape index: {}]
  %s2 = inlined_call_operand.hbm [shape: bf16[9,16,16], index: 2, kind: input, shape index: {}]
  %s3 = inlined_call_operand.vmem [shape: f32[3,1,16], index: 3, kind: input, shape index: {}]
  %s4 = inlined_call_operand.hbm [shape: bf16[3,16,16], index: 4, kind: input, shape index: {}]
  %s5 = inlined_call_operand.vmem [shape: f32[3,1,16], index: 5, kind: input, shape index: {}]
  %s6 = inlined_call_operand.vmem [shape: bf16[16,128], index: 6, kind: input, shape index: {}]
  %s7 = inlined_call_operand.vmem [shape: f32[1,128], index: 7, kind: input, shape index: {}]
  %s8 = inlined_call_operand.hbm [shape: bf16[2,16,128], index: 8, kind: output, shape index: {}]
  %s9 = sld [smem:[#allocation0]]
  $region73: #{tpu_custom_call.1} parent=0
    _
  %s11 = ssub.s32 1, %s9
  %s12 = scalar_select 0, %s11, %s9
  $region1: #{tpu_custom_call.1} parent=0
    #allocation3 [shape = 'u8[36864]{0}', space=vmem, size = 0x9000, scoped, tag = 'input window, operand 2, single buffered']
    #allocation4 [shape = 's32[2]{0}', space=sflag, size = 0x8, scoped, tag = 'scoped memory for tpu_custom_call.1']
    #allocation5 [shape = 's32[2]{0}', space=sflag, size = 0x8, scoped, tag = 'scoped memory for tpu_custom_call.1']
    #allocation6 [shape = 'u8[12288]{0}', space=vmem, size = 0x3000, scoped, tag = 'input window, operand 4, single buffered']
    #allocation7 [shape = 's32[1]{0}', space=sflag, size = 0x4, scoped, tag = 'scoped memory for tpu_custom_call.1']
    #allocation8 [shape = 'u8[8192]{0}', space=vmem, size = 0x2000, scoped, tag = 'output window, operand 0']
    %13 = vsyncpa [#allocation4], 0
    %14 = vsyncpa [#allocation7], 0
    %15 = vsyncpa [#allocation5], 0
    %s16 = scalar_lea.sflag [#allocation5], 1
    %17 = vsyncpa %s16, 0
    loop: start=0, step=1, limit=4
    $region2: #{tpu_custom_call.1} parent=1 // loop_pre_header
      _
    $region3: #{tpu_custom_call.1} parent=1 // loop_header
      %s19 = sphi 0, %s23
      %p20 = scmp.ge.s32.totalorder %s19, 4
      %s29 = sphi 0, %s31
      %s32 = sphi 0, %s29
      %s33 = sphi 0, %s32
      %s49 = sphi 0, %s33
      %s55 = sphi 0, %s57
      %s58 = sphi 0, %s55
      %s59 = sphi 0, %s58
      %s75 = sphi 0, %s59
      %s79 = sphi 0, %s79
      %s81 = sphi 0, %s79
      %s82 = sphi 0, %s81
      %s96 = sphi 0, %s82
      %s100 = sphi 0, %s100
      %s102 = sphi 0, %s100
      %s103 = sphi 0, %s102
      %s117 = sphi 0, %s103
      %s121 = sphi 0, %s121
      %s123 = sphi 0, %s121
      %s124 = sphi 0, %s123
      %s138 = sphi 0, %s124
      %s142 = sphi 0, %s142
      %s144 = sphi 0, %s142
      %s145 = sphi 0, %s144
      %s159 = sphi 0, %s145
      %s163 = sphi 0, %s163
      %s165 = sphi 0, %s163
      %s166 = sphi 0, %s165
      %s180 = sphi 0, %s166
      %s184 = sphi 0, %s184
      %s186 = sphi 0, %s184
      %s187 = sphi 0, %s186
      %s201 = sphi 0, %s187
      %s207 = sphi 0, %s209
      %s210 = sphi 0, %s207
      %s211 = sphi 0, %s210
      %s227 = sphi 0, %s211
    $region4: #{tpu_custom_call.1} parent=1 // loop_header_branch
      %22 = sbr.rel (%p20) target = $region8
    $region5: #{tpu_custom_call.1} parent=1 // loop_body
      %s24 = ssub.s32 %s19, 1
      %s25 = ssub.s32 %s19, 2
      %s26 = sadd.s32 %s19, 1
      %s27 = ssub.s32 %s19, %s26
      %p28 = scmp.eq.s32.totalorder %s27, 0
      %s30 = sadd.s32 %s29, 1
      %s31 = scalar_select %p28, %s29, %s30
      %p34 = pneg %p28
      %p35 = scmp.eq.s32.totalorder %s19, 1
      %p36 = por %p34, %p35
      %p37 = scmp.ne.s32.totalorder %s29, %s32
      %p38 = scmp.eq.s32.totalorder %s19, 0
      %p39 = por %p37, %p38
      %p40 = scmp.ne.s32.totalorder %s29, %s32
      %p41 = scmp.eq.s32.totalorder %s24, 1
      %p42 = por %p40, %p41
      %p43 = scmp.ne.s32.totalorder %s32, %s33
      %p44 = scmp.eq.s32.totalorder %s24, 0
      %p45 = por %p43, %p44
      %p46 = scmp.ne.s32.totalorder %s32, %s33
      %p47 = scmp.eq.s32.totalorder %s25, 1
      %p48 = por %p46, %p47
      %p50 = scmp.ne.s32.totalorder %s33, %s49
      %p51 = scmp.eq.s32.totalorder %s25, 0
      %p52 = por %p50, %p51
      %s53 = ssub.s32 %s19, %s26
      %p54 = scmp.eq.s32.totalorder %s53, 0
      %s56 = sadd.s32 %s55, 1
      %s57 = scalar_select %p54, %s55, %s56
      %p60 = pneg %p54
      %p61 = scmp.eq.s32.totalorder %s19, 1
      %p62 = por %p60, %p61
      %p63 = scmp.ne.s32.totalorder %s55, %s58
      %p64 = scmp.eq.s32.totalorder %s19, 0
      %p65 = por %p63, %p64
      %p66 = scmp.ne.s32.totalorder %s55, %s58
      %p67 = scmp.eq.s32.totalorder %s24, 1
      %p68 = por %p66, %p67
      %p69 = scmp.ne.s32.totalorder %s58, %s59
      %p70 = scmp.eq.s32.totalorder %s24, 0
      %p71 = por %p69, %p70
      %p72 = scmp.ne.s32.totalorder %s58, %s59
      %p73 = scmp.eq.s32.totalorder %s25, 1
      %p74 = por %p72, %p73
      %p76 = scmp.ne.s32.totalorder %s59, %s75
      %p77 = scmp.eq.s32.totalorder %s25, 0
      %p78 = por %p76, %p77
      %s80 = sadd.s32 %s79, 1
      %p83 = scmp.eq.s32.totalorder %s19, 1
      %p84 = scmp.ne.s32.totalorder %s79, %s81
      %p85 = scmp.eq.s32.totalorder %s19, 0
      %p86 = por %p84, %p85
      %p87 = scmp.ne.s32.totalorder %s79, %s81
      %p88 = scmp.eq.s32.totalorder %s24, 1
      %p89 = por %p87, %p88
      %p90 = scmp.ne.s32.totalorder %s81, %s82
      %p91 = scmp.eq.s32.totalorder %s24, 0
      %p92 = por %p90, %p91
      %p93 = scmp.ne.s32.totalorder %s81, %s82
      %p94 = scmp.eq.s32.totalorder %s25, 1
      %p95 = por %p93, %p94
      %p97 = scmp.ne.s32.totalorder %s82, %s96
      %p98 = scmp.eq.s32.totalorder %s25, 0
      %p99 = por %p97, %p98
      %s101 = sadd.s32 %s100, 1
      %p104 = scmp.eq.s32.totalorder %s19, 1
      %p105 = scmp.ne.s32.totalorder %s100, %s102
      %p106 = scmp.eq.s32.totalorder %s19, 0
      %p107 = por %p105, %p106
      %p108 = scmp.ne.s32.totalorder %s100, %s102
      %p109 = scmp.eq.s32.totalorder %s24, 1
      %p110 = por %p108, %p109
      %p111 = scmp.ne.s32.totalorder %s102, %s103
      %p112 = scmp.eq.s32.totalorder %s24, 0
      %p113 = por %p111, %p112
      %p114 = scmp.ne.s32.totalorder %s102, %s103
      %p115 = scmp.eq.s32.totalorder %s25, 1
      %p116 = por %p114, %p115
      %p118 = scmp.ne.s32.totalorder %s103, %s117
      %p119 = scmp.eq.s32.totalorder %s25, 0
      %p120 = por %p118, %p119
      %s122 = sadd.s32 %s121, 1
      %p125 = scmp.eq.s32.totalorder %s19, 1
      %p126 = scmp.ne.s32.totalorder %s121, %s123
      %p127 = scmp.eq.s32.totalorder %s19, 0
      %p128 = por %p126, %p127
      %p129 = scmp.ne.s32.totalorder %s121, %s123
      %p130 = scmp.eq.s32.totalorder %s24, 1
      %p131 = por %p129, %p130
      %p132 = scmp.ne.s32.totalorder %s123, %s124
      %p133 = scmp.eq.s32.totalorder %s24, 0
      %p134 = por %p132, %p133
      %p135 = scmp.ne.s32.totalorder %s123, %s124
      %p136 = scmp.eq.s32.totalorder %s25, 1
      %p137 = por %p135, %p136
      %p139 = scmp.ne.s32.totalorder %s124, %s138
      %p140 = scmp.eq.s32.totalorder %s25, 0
      %p141 = por %p139, %p140
      %s143 = sadd.s32 %s142, 1
      %p146 = scmp.eq.s32.totalorder %s19, 1
      %p147 = scmp.ne.s32.totalorder %s142, %s144
      %p148 = scmp.eq.s32.totalorder %s19, 0
      %p149 = por %p147, %p148
      %p150 = scmp.ne.s32.totalorder %s142, %s144
      %p151 = scmp.eq.s32.totalorder %s24, 1
      %p152 = por %p150, %p151
      %p153 = scmp.ne.s32.totalorder %s144, %s145
      %p154 = scmp.eq.s32.totalorder %s24, 0
      %p155 = por %p153, %p154
      %p156 = scmp.ne.s32.totalorder %s144, %s145
      %p157 = scmp.eq.s32.totalorder %s25, 1
      %p158 = por %p156, %p157
      %p160 = scmp.ne.s32.totalorder %s145, %s159
      %p161 = scmp.eq.s32.totalorder %s25, 0
      %p162 = por %p160, %p161
      %s164 = sadd.s32 %s163, 1
      %p167 = scmp.eq.s32.totalorder %s19, 1
      %p168 = scmp.ne.s32.totalorder %s163, %s165
      %p169 = scmp.eq.s32.totalorder %s19, 0
      %p170 = por %p168, %p169
      %p171 = scmp.ne.s32.totalorder %s163, %s165
      %p172 = scmp.eq.s32.totalorder %s24, 1
      %p173 = por %p171, %p172
      %p174 = scmp.ne.s32.totalorder %s165, %s166
      %p175 = scmp.eq.s32.totalorder %s24, 0
      %p176 = por %p174, %p175
      %p177 = scmp.ne.s32.totalorder %s165, %s166
      %p178 = scmp.eq.s32.totalorder %s25, 1
      %p179 = por %p177, %p178
      %p181 = scmp.ne.s32.totalorder %s166, %s180
      %p182 = scmp.eq.s32.totalorder %s25, 0
      %p183 = por %p181, %p182
      %s185 = sadd.s32 %s184, 1
      %p188 = scmp.eq.s32.totalorder %s19, 1
      %p189 = scmp.ne.s32.totalorder %s184, %s186
      %p190 = scmp.eq.s32.totalorder %s19, 0
      %p191 = por %p189, %p190
      %p192 = scmp.ne.s32.totalorder %s184, %s186
      %p193 = scmp.eq.s32.totalorder %s24, 1
      %p194 = por %p192, %p193
      %p195 = scmp.ne.s32.totalorder %s186, %s187
      %p196 = scmp.eq.s32.totalorder %s24, 0
      %p197 = por %p195, %p196
      %p198 = scmp.ne.s32.totalorder %s186, %s187
      %p199 = scmp.eq.s32.totalorder %s25, 1
      %p200 = por %p198, %p199
      %p202 = scmp.ne.s32.totalorder %s187, %s201
      %p203 = scmp.eq.s32.totalorder %s25, 0
      %p204 = por %p202, %p203
      %s205 = ssub.s32 %s19, %s26
      %p206 = scmp.eq.s32.totalorder %s205, 0
      %s208 = sadd.s32 %s207, 1
      %s209 = scalar_select %p206, %s207, %s208
      %p212 = pneg %p206
      %p213 = scmp.eq.s32.totalorder %s19, 1
      %p214 = por %p212, %p213
      %p215 = scmp.ne.s32.totalorder %s207, %s210
      %p216 = scmp.eq.s32.totalorder %s19, 0
      %p217 = por %p215, %p216
      %p218 = scmp.ne.s32.totalorder %s207, %s210
      %p219 = scmp.eq.s32.totalorder %s24, 1
      %p220 = por %p218, %p219
      %p221 = scmp.ne.s32.totalorder %s210, %s211
      %p222 = scmp.eq.s32.totalorder %s24, 0
      %p223 = por %p221, %p222
      %p224 = scmp.ne.s32.totalorder %s210, %s211
      %p225 = scmp.eq.s32.totalorder %s25, 1
      %p226 = por %p224, %p225
      %p228 = scmp.ne.s32.totalorder %s211, %s227
      %p229 = scmp.eq.s32.totalorder %s25, 0
      %p230 = por %p228, %p229
      %p231 = scmp.le.s32.totalorder 1, %s19
      %p232 = scmp.lt.s32.totalorder %s19, 3
      %p233 = pnand %p231, %p232
      %p234 = pneg %p233
      // Predicated region
      $region9: #{tpu_custom_call.1} parent=5 // pred_check
        _
      $region10: #{tpu_custom_call.1} parent=5 // pred_check_branch
        %236 = sbr.rel (%p233) target = $region12
      $region11: #{tpu_custom_call.1} parent=5 // pred_region
        %s237 = ssub.s32 %s19, 1
        // Predicated region
        $region13: #{tpu_custom_call.1} parent=11 // pred_check
          %p238 = pneg %p92
        $region14: #{tpu_custom_call.1} parent=11 // pred_check_branch
          %240 = sbr.rel (%p238) target = $region16
        $region15: #{tpu_custom_call.1} parent=11 // pred_region
          %s242 = ssub.s32 1152, 1152
          %243 = vsyncadd [#allocation4], %s242
          %s244 = sshll.u32 [#allocation3], 4
          %s245 = int_to_ptr.vmem [resolvable:$true] %s244
          %250 = dma.hbm_to_vmem [thread:$0]  %s2, 1152, %s245, [#allocation4], 64, 64, 4
        $region16: #{tpu_custom_call.1} parent=11 // pred_fallthru
          _
        // Predicated region
        $region17: #{tpu_custom_call.1} parent=11 // pred_check
          %p251 = pneg %p113
        $region18: #{tpu_custom_call.1} parent=11 // pred_check_branch
          %253 = sbr.rel (%p251) target = $region20
        $region19: #{tpu_custom_call.1} parent=11 // pred_region
          _
        $region20: #{tpu_custom_call.1} parent=11 // pred_fallthru
          _
        // Predicated region
        $region21: #{tpu_custom_call.1} parent=11 // pred_check
          %p254 = pneg %p134
        $region22: #{tpu_custom_call.1} parent=11 // pred_check_branch
          %256 = sbr.rel (%p254) target = $region24
        $region23: #{tpu_custom_call.1} parent=11 // pred_region
          %s258 = ssub.s32 384, 384
          %259 = vsyncadd [#allocation7], %s258
          %s260 = sshll.u32 [#allocation6], 4
          %s261 = int_to_ptr.vmem [resolvable:$true] %s260
          %266 = dma.hbm_to_vmem [thread:$0]  %s4, 384, %s261, [#allocation7], 64, 64, 4
        $region24: #{tpu_custom_call.1} parent=11 // pred_fallthru
          _
        // Predicated region
        $region25: #{tpu_custom_call.1} parent=11 // pred_check
          %p267 = pneg %p155
        $region26: #{tpu_custom_call.1} parent=11 // pred_check_branch
          %269 = sbr.rel (%p267) target = $region28
        $region27: #{tpu_custom_call.1} parent=11 // pred_region
          _
        $region28: #{tpu_custom_call.1} parent=11 // pred_fallthru
          _
        // Predicated region
        $region29: #{tpu_custom_call.1} parent=11 // pred_check
          %p270 = pneg %p176
        $region30: #{tpu_custom_call.1} parent=11 // pred_check_branch
          %272 = sbr.rel (%p270) target = $region32
        $region31: #{tpu_custom_call.1} parent=11 // pred_region
          _
        $region32: #{tpu_custom_call.1} parent=11 // pred_fallthru
          _
        // Predicated region
        $region33: #{tpu_custom_call.1} parent=11 // pred_check
          %p273 = pneg %p197
        $region34: #{tpu_custom_call.1} parent=11 // pred_check_branch
          %275 = sbr.rel (%p273) target = $region36
        $region35: #{tpu_custom_call.1} parent=11 // pred_region
          _
        $region36: #{tpu_custom_call.1} parent=11 // pred_fallthru
          _
      $region12: #{tpu_custom_call.1} parent=5 // pred_fallthru
        _
      %p276 = scmp.lt.s32.totalorder %s19, 2
      // Predicated region
      $region37: #{tpu_custom_call.1} parent=5 // pred_check
        %p277 = pneg %p276
      $region38: #{tpu_custom_call.1} parent=5 // pred_check_branch
        %279 = sbr.rel (%p277) target = $region40
      $region39: #{tpu_custom_call.1} parent=5 // pred_region
        // Predicated region
        $region41: #{tpu_custom_call.1} parent=39 // pred_check
          %p280 = pneg %p39
        $region42: #{tpu_custom_call.1} parent=39 // pred_check_branch
          %282 = sbr.rel (%p280) target = $region44
        $region43: #{tpu_custom_call.1} parent=39 // pred_region
          %p283 = scmp.lt.s32.totalorder %s19, 1
          %s284 = scalar_select %p283, %s19, 1
          %s285 = smul.addr %s284, 2
          %s286 = smul.addr %s285, 8
          %s287 = scalar_lea.vmem %s0, %s286
        $region44: #{tpu_custom_call.1} parent=39 // pred_fallthru
          _
        // Predicated region
        $region45: #{tpu_custom_call.1} parent=39 // pred_check
          %p288 = pneg %p65
        $region46: #{tpu_custom_call.1} parent=39 // pred_check_branch
          %290 = sbr.rel (%p288) target = $region48
        $region47: #{tpu_custom_call.1} parent=39 // pred_region
          %p291 = scmp.lt.s32.totalorder %s19, 1
          %s292 = scalar_select %p291, %s19, 1
          %s293 = smul.addr %s292, 2
          %s294 = smul.addr %s293, 8
          %s295 = scalar_lea.vmem %s1, %s294
        $region48: #{tpu_custom_call.1} parent=39 // pred_fallthru
          _
      $region40: #{tpu_custom_call.1} parent=5 // pred_fallthru
        _
      %p296 = scmp.le.s32.totalorder 1, %s19
      %p297 = scmp.lt.s32.totalorder %s19, 3
      %p298 = pnand %p296, %p297
      %p299 = pneg %p298
      // Predicated region
      $region49: #{tpu_custom_call.1} parent=5 // pred_check
        _
      $region50: #{tpu_custom_call.1} parent=5 // pred_check_branch
        %301 = sbr.rel (%p298) target = $region52
      $region51: #{tpu_custom_call.1} parent=5 // pred_region
        %s302 = ssub.s32 %s19, 1
        // Predicated region
        $region53: #{tpu_custom_call.1} parent=51 // pred_check
          %p303 = pneg %p92
        $region54: #{tpu_custom_call.1} parent=51 // pred_check_branch
          %305 = sbr.rel (%p303) target = $region56
        $region55: #{tpu_custom_call.1} parent=51 // pred_region
          %306 = dma.done [#allocation4], 1152
        $region56: #{tpu_custom_call.1} parent=51 // pred_fallthru
          _
        // Predicated region
        $region57: #{tpu_custom_call.1} parent=51 // pred_check
          %p307 = pneg %p134
        $region58: #{tpu_custom_call.1} parent=51 // pred_check_branch
          %309 = sbr.rel (%p307) target = $region60
        $region59: #{tpu_custom_call.1} parent=51 // pred_region
          %310 = dma.done [#allocation7], 384
        $region60: #{tpu_custom_call.1} parent=51 // pred_fallthru
          _
        %p311 = scmp.lt.s32.totalorder %s24, 1
        %s312 = scalar_select %p311, %s24, 1
        %s313 = smul.addr %s312, 2
        %s314 = smul.addr %s313, 8
        %s315 = scalar_lea.vmem %s0, %s314
        %p316 = pneg %p45
        %p317 = pneg %p42
        %p318 = scmp.lt.s32.totalorder %s24, 1
        %s319 = scalar_select %p318, %s24, 1
        %s320 = smul.addr %s319, 2
        %s321 = smul.addr %s320, 8
        %s322 = scalar_lea.vmem %s1, %s321
        %p323 = pneg %p71
        %p324 = pneg %p68
        %p325 = pneg %p92
        %p326 = pneg %p89
        %p327 = pneg %p113
        %p328 = pneg %p110
        %p329 = pneg %p134
        %p330 = pneg %p131
        %p331 = pneg %p155
        %p332 = pneg %p152
        %p333 = pneg %p176
        %p334 = pneg %p173
        %p335 = pneg %p197
        %p336 = pneg %p194
        %p337 = pneg %p223
        %p338 = pneg %p220
        %s339 = sand.u32 %s210, 1
        %s340 = scalar_lea.sflag [#allocation5], %s339
        %s341 = sand.u32 %s210, 1
        %s342 = smul.addr %s341, 8
        %s343 = scalar_lea.vmem [#allocation8], %s342
        %p344 = scmp.lt.s32.totalorder %s24, 1
        %s345 = scalar_select %p344, %s24, 1
        %s346 = smul.addr %s345, 2
        %s347 = smul.addr %s346, 8
        %s348 = scalar_lea.vmem %s0, %s347
        %p349 = scmp.lt.s32.totalorder %s24, 1
        %s350 = scalar_select %p349, %s24, 1
        %s351 = smul.addr %s350, 2
        %s352 = smul.addr %s351, 8
        %s353 = scalar_lea.vmem %s1, %s352
        %v355 = vld [vmem:[%s353] sm:$0xff]
        %v356 = vld [vmem:[%s353 + $0x8] sm:$0xff]
        %v357 = vld [vmem:[%s348] sm:$0xff]
        %v358 = vld [vmem:[%s348 + $0x8] sm:$0xff]
        %360 = vset.pattern.permute.xlu0 0
        %361 = vperm.xlu0 %360, %v355
        %v362 = vpop.permute.xlu0 %361
        %365 = vset.pattern.permute.xlu0 0
        %366 = vperm.xlu0 %365, %v356
        %v367 = vpop.permute.xlu0 %366
        %vm369 = vcmask 130048
        %370 = vst.msk [vmem:[#allocation2] sm:$0xff] %vm369, 0.0
        %371 = vst.msk [vmem:[#allocation2 + $0x18] sm:$0xff] %vm369, 0.0
        %372 = vst.msk [vmem:[#allocation2 + $0x8] sm:$0xff] %vm369, %v357
        %373 = vst.msk [vmem:[#allocation2 + $0x10] sm:$0xff] %vm369, %v358
        %v374 = vld [vmem:[#allocation2 + $0x8] sm:$0xff]
        %v375 = vld [vmem:[#allocation2 + $0x10] sm:$0xff]
        %v376 = vld [vmem:[#allocation2 + $0x7] sm:$0xff]
        %v377 = vld [vmem:[#allocation2 + $0xf] sm:$0xff]
        %v378 = vpack.c.bf16 %v377, %v376
        %v379 = vld [vmem:[#allocation3] sm:$0xf]
        %v380 = vld [vmem:[#allocation3 + $0x4] sm:$0xf]
        %v381 = vpack.c.bf16 %v375, %v374
        %s382 = scalar_lea.vmem [#allocation3], 8
        %v383 = vld [vmem:[%s382] sm:$0xf]
        %v384 = vld [vmem:[%s382 + $0x4] sm:$0xf]
        %v387 = vunpack.c.l.b16 %v383
        %v388 = vunpack.c.l.b16 %v384
        %v389 = vpack.c.b16 %v388, %v387
        %v392 = vsel %vm369, %v381, 0
        %394 = vmatprep.subr.bf16.mxu0 0
        %395 = vmatpush1.bf16.msra.mxu0 %v389
        %396 = vmatprep.subr.bf16.mxu0 0
        %397 = vmatpush1.bf16.msra.mxu0 0
        %398 = vmatprep.subr.bf16.mxu0 0
        %399 = vmatpush1.bf16.msra.mxu0 0
        %400 = vmatprep.subr.bf16.mxu0 0
        %401 = vmatpush1.bf16.msra.mxu0 0
        %402 = vmatprep.subr.bf16.mxu0 0
        %403 = vmatpush1.bf16.msra.mxu0 0
        %404 = vmatprep.subr.bf16.mxu0 0
        %405 = vmatpush1.bf16.msra.mxu0 0
        %406 = vmatprep.subr.bf16.mxu0 0
        %407 = vmatpush1.bf16.msra.mxu0 0
        %408 = vmatprep.subr.bf16.mxu0 0
        %409 = vmatpush1.bf16.msra.mxu0 0
        %410 = vmatprep.subr.bf16.mxu0 0
        %411 = vmatpush1.bf16.msra.mxu0 0
        %412 = vmatprep.subr.bf16.mxu0 0
        %413 = vmatpush1.bf16.msra.mxu0 0
        %414 = vmatprep.subr.bf16.mxu0 0
        %415 = vmatpush1.bf16.msra.mxu0 0
        %416 = vmatprep.subr.bf16.mxu0 0
        %417 = vmatpush1.bf16.msra.mxu0 0
        %418 = vmatprep.subr.bf16.mxu0 0
        %419 = vmatpush1.bf16.msra.mxu0 0
        %420 = vmatprep.subr.bf16.mxu0 0
        %421 = vmatpush1.bf16.msra.mxu0 0
        %422 = vmatprep.subr.bf16.mxu0 0
        %423 = vmatpush1.bf16.msra.mxu0 0
        %424 = vmatprep.subr.bf16.mxu0 0
        %425 = vmatpush1.bf16.msra.mxu0 0
        %426 = vmatprep.mubr.bf16.mxu0 0
        %427 = vmatmul.mubr.bf16.gmra.mrb[0].mxu0 %v392
        %v428 = vpop.f32.mrb[0].mxu0
        %v429 = vadd.f32 0.0, %v428
        %v430 = vpop.f32.mrb[0].mxu0
        %v431 = vpop.f32.mrb[0].mxu0
        %v432 = vadd.f32 0.0, %v431
        %v433 = vpop.f32.mrb[0].mxu0
        %434 = vdwg.mxu0
        %v437 = vunpack.c.l.b16 %v379
        %v438 = vunpack.c.l.b16 %v380
        %v439 = vpack.c.b16 %v438, %v437
        %v442 = vsel %vm369, %v378, 0
        %444 = vmatprep.subr.bf16.mxu0 0
        %445 = vmatpush1.bf16.msra.mxu0 %v439
        %446 = vmatprep.subr.bf16.mxu0 0
        %447 = vmatpush1.bf16.msra.mxu0 0
        %448 = vmatprep.subr.bf16.mxu0 0
        %449 = vmatpush1.bf16.msra.mxu0 0
        %450 = vmatprep.subr.bf16.mxu0 0
        %451 = vmatpush1.bf16.msra.mxu0 0
        %452 = vmatprep.subr.bf16.mxu0 0
        %453 = vmatpush1.bf16.msra.mxu0 0
        %454 = vmatprep.subr.bf16.mxu0 0
        %455 = vmatpush1.bf16.msra.mxu0 0
        %456 = vmatprep.subr.bf16.mxu0 0
        %457 = vmatpush1.bf16.msra.mxu0 0
        %458 = vmatprep.subr.bf16.mxu0 0
        %459 = vmatpush1.bf16.msra.mxu0 0
        %460 = vmatprep.subr.bf16.mxu0 0
        %461 = vmatpush1.bf16.msra.mxu0 0
        %462 = vmatprep.subr.bf16.mxu0 0
        %463 = vmatpush1.bf16.msra.mxu0 0
        %464 = vmatprep.subr.bf16.mxu0 0
        %465 = vmatpush1.bf16.msra.mxu0 0
        %466 = vmatprep.subr.bf16.mxu0 0
        %467 = vmatpush1.bf16.msra.mxu0 0
        %468 = vmatprep.subr.bf16.mxu0 0
        %469 = vmatpush1.bf16.msra.mxu0 0
        %470 = vmatprep.subr.bf16.mxu0 0
        %471 = vmatpush1.bf16.msra.mxu0 0
        %472 = vmatprep.subr.bf16.mxu0 0
        %473 = vmatpush1.bf16.msra.mxu0 0
        %474 = vmatprep.subr.bf16.mxu0 0
        %475 = vmatpush1.bf16.msra.mxu0 0
        %476 = vmatprep.mubr.bf16.mxu0 0
        %477 = vmatmul.mubr.bf16.gmra.mrb[0].mxu0 %v442
        %v478 = vpop.f32.mrb[0].mxu0
        %v479 = vadd.f32 %v429, %v478
        %v480 = vpop.f32.mrb[0].mxu0
        %v481 = vpop.f32.mrb[0].mxu0
        %v482 = vadd.f32 %v432, %v481
        %v483 = vpop.f32.mrb[0].mxu0
        %484 = vdwg.mxu0
        %v485 = vld [vmem:[#allocation2 + $0x9] sm:$0xff]
        %v486 = vld [vmem:[#allocation2 + $0x11] sm:$0xff]
        %v487 = vpack.c.bf16 %v486, %v485
        %s488 = scalar_lea.vmem [#allocation3], 16
        %v489 = vld [vmem:[%s488] sm:$0xf]
        %v490 = vld [vmem:[%s488 + $0x4] sm:$0xf]
        %v493 = vunpack.c.l.b16 %v489
        %v494 = vunpack.c.l.b16 %v490
        %v495 = vpack.c.b16 %v494, %v493
        %v498 = vsel %vm369, %v487, 0
        %500 = vmatprep.subr.bf16.mxu0 0
        %501 = vmatpush1.bf16.msra.mxu0 %v495
        %502 = vmatprep.subr.bf16.mxu0 0
        %503 = vmatpush1.bf16.msra.mxu0 0
        %504 = vmatprep.subr.bf16.mxu0 0
        %505 = vmatpush1.bf16.msra.mxu0 0
        %506 = vmatprep.subr.bf16.mxu0 0
        %507 = vmatpush1.bf16.msra.mxu0 0
        %508 = vmatprep.subr.bf16.mxu0 0
        %509 = vmatpush1.bf16.msra.mxu0 0
        %510 = vmatprep.subr.bf16.mxu0 0
        %511 = vmatpush1.bf16.msra.mxu0 0
        %512 = vmatprep.subr.bf16.mxu0 0
        %513 = vmatpush1.bf16.msra.mxu0 0
        %514 = vmatprep.subr.bf16.mxu0 0
        %515 = vmatpush1.bf16.msra.mxu0 0
        %516 = vmatprep.subr.bf16.mxu0 0
        %517 = vmatpush1.bf16.msra.mxu0 0
        %518 = vmatprep.subr.bf16.mxu0 0
        %519 = vmatpush1.bf16.msra.mxu0 0
        %520 = vmatprep.subr.bf16.mxu0 0
        %521 = vmatpush1.bf16.msra.mxu0 0
        %522 = vmatprep.subr.bf16.mxu0 0
        %523 = vmatpush1.bf16.msra.mxu0 0
        %524 = vmatprep.subr.bf16.mxu0 0
        %525 = vmatpush1.bf16.msra.mxu0 0
        %526 = vmatprep.subr.bf16.mxu0 0
        %527 = vmatpush1.bf16.msra.mxu0 0
        %528 = vmatprep.subr.bf16.mxu0 0
        %529 = vmatpush1.bf16.msra.mxu0 0
        %530 = vmatprep.subr.bf16.mxu0 0
        %531 = vmatpush1.bf16.msra.mxu0 0
        %532 = vmatprep.mubr.bf16.mxu0 0
        %533 = vmatmul.mubr.bf16.gmra.mrb[0].mxu0 %v498
        %v534 = vpop.f32.mrb[0].mxu0
        %v535 = vadd.f32 0.0, %v534
        %v536 = vpop.f32.mrb[0].mxu0
        %v537 = vpop.f32.mrb[0].mxu0
        %v538 = vadd.f32 0.0, %v537
        %v539 = vpop.f32.mrb[0].mxu0
        %540 = vdwg.mxu0
        %v541 = vadd.f32 %v479, %v535
        %v542 = vadd.f32 %v482, %v538
        %v543 = vld [vmem:[%s3] sm:$0x1]
        %v545 = vlaneseq
        %v546 = vshrl.u32 %v545, 7
        %v547 = vsub.s32 0, %v546
        %v548 = vrot.slane %v543, %v547
        %v550 = vadd.f32 %v541, %v548
        %v551 = vadd.f32 %v542, %v548
        %v552 = vmax.f32 %v550, 0.0
        %v553 = vmax.f32 %v551, 0.0
        %v554 = vpack.c.bf16 %v553, %v552
        %v555 = vld [vmem:[#allocation6] sm:$0xf]
        %v556 = vld [vmem:[#allocation6 + $0x4] sm:$0xf]
        %v557 = vld [vmem:[%s5] sm:$0x1]
        %v559 = vlaneseq
        %v560 = vshrl.u32 %v559, 7
        %v561 = vsub.s32 0, %v560
        %v562 = vrot.slane %v557, %v561
        %v566 = vunpack.c.l.b16 %v555
        %v567 = vunpack.c.l.b16 %v556
        %v568 = vpack.c.b16 %v567, %v566
        %v571 = vsel %vm369, %v554, 0
        %573 = vmatprep.subr.bf16.mxu0 0
        %574 = vmatpush1.bf16.msra.mxu0 %v568
        %575 = vmatprep.subr.bf16.mxu0 0
        %576 = vmatpush1.bf16.msra.mxu0 0
        %577 = vmatprep.subr.bf16.mxu0 0
        %578 = vmatpush1.bf16.msra.mxu0 0
        %579 = vmatprep.subr.bf16.mxu0 0
        %580 = vmatpush1.bf16.msra.mxu0 0
        %581 = vmatprep.subr.bf16.mxu0 0
        %582 = vmatpush1.bf16.msra.mxu0 0
        %583 = vmatprep.subr.bf16.mxu0 0
        %584 = vmatpush1.bf16.msra.mxu0 0
        %585 = vmatprep.subr.bf16.mxu0 0
        %586 = vmatpush1.bf16.msra.mxu0 0
        %587 = vmatprep.subr.bf16.mxu0 0
        %588 = vmatpush1.bf16.msra.mxu0 0
        %589 = vmatprep.subr.bf16.mxu0 0
        %590 = vmatpush1.bf16.msra.mxu0 0
        %591 = vmatprep.subr.bf16.mxu0 0
        %592 = vmatpush1.bf16.msra.mxu0 0
        %593 = vmatprep.subr.bf16.mxu0 0
        %594 = vmatpush1.bf16.msra.mxu0 0
        %595 = vmatprep.subr.bf16.mxu0 0
        %596 = vmatpush1.bf16.msra.mxu0 0
        %597 = vmatprep.subr.bf16.mxu0 0
        %598 = vmatpush1.bf16.msra.mxu0 0
        %599 = vmatprep.subr.bf16.mxu0 0
        %600 = vmatpush1.bf16.msra.mxu0 0
        %601 = vmatprep.subr.bf16.mxu0 0
        %602 = vmatpush1.bf16.msra.mxu0 0
        %603 = vmatprep.subr.bf16.mxu0 0
        %604 = vmatpush1.bf16.msra.mxu0 0
        %605 = vmatprep.mubr.bf16.mxu0 0
        %606 = vmatmul.mubr.bf16.gmra.mrb[0].mxu0 %v571
        %v607 = vpop.f32.mrb[0].mxu0
        %v608 = vadd.f32 %v562, %v607
        %v609 = vpop.f32.mrb[0].mxu0
        %v610 = vpop.f32.mrb[0].mxu0
        %v611 = vadd.f32 %v562, %v610
        %v612 = vpop.f32.mrb[0].mxu0
        %613 = vdwg.mxu0
        %v614 = vadd.f32 %v374, %v608
        %v615 = vadd.f32 %v375, %v611
        %v616 = vmul.f32 %v614, %v362
        %v617 = vmul.f32 %v615, %v367
        %618 = vst.msk [vmem:[#allocation2 + $0x8] sm:$0xff] %vm369, %v616
        %619 = vst.msk [vmem:[#allocation2 + $0x10] sm:$0xff] %vm369, %v617
        %v620 = vld [vmem:[#allocation2 + $0x8] sm:$0xff]
        %v621 = vld [vmem:[#allocation2 + $0x10] sm:$0xff]
        %v622 = vld [vmem:[#allocation2 + $0x6] sm:$0xff]
        %v623 = vld [vmem:[#allocation2 + $0xe] sm:$0xff]
        %v624 = vpack.c.bf16 %v623, %v622
        %s625 = scalar_lea.vmem [#allocation3], 24
        %v626 = vld [vmem:[%s625] sm:$0xf]
        %v627 = vld [vmem:[%s625 + $0x4] sm:$0xf]
        %v628 = vpack.c.bf16 %v621, %v620
        %s629 = scalar_lea.vmem [#allocation3], 32
        %v630 = vld [vmem:[%s629] sm:$0xf]
        %v631 = vld [vmem:[%s629 + $0x4] sm:$0xf]
        %v634 = vunpack.c.l.b16 %v630
        %v635 = vunpack.c.l.b16 %v631
        %v636 = vpack.c.b16 %v635, %v634
        %v639 = vsel %vm369, %v628, 0
        %641 = vmatprep.subr.bf16.mxu0 0
        %642 = vmatpush1.bf16.msra.mxu0 %v636
        %643 = vmatprep.subr.bf16.mxu0 0
        %644 = vmatpush1.bf16.msra.mxu0 0
        %645 = vmatprep.subr.bf16.mxu0 0
        %646 = vmatpush1.bf16.msra.mxu0 0
        %647 = vmatprep.subr.bf16.mxu0 0
        %648 = vmatpush1.bf16.msra.mxu0 0
        %649 = vmatprep.subr.bf16.mxu0 0
        %650 = vmatpush1.bf16.msra.mxu0 0
        %651 = vmatprep.subr.bf16.mxu0 0
        %652 = vmatpush1.bf16.msra.mxu0 0
        %653 = vmatprep.subr.bf16.mxu0 0
        %654 = vmatpush1.bf16.msra.mxu0 0
        %655 = vmatprep.subr.bf16.mxu0 0
        %656 = vmatpush1.bf16.msra.mxu0 0
        %657 = vmatprep.subr.bf16.mxu0 0
        %658 = vmatpush1.bf16.msra.mxu0 0
        %659 = vmatprep.subr.bf16.mxu0 0
        %660 = vmatpush1.bf16.msra.mxu0 0
        %661 = vmatprep.subr.bf16.mxu0 0
        %662 = vmatpush1.bf16.msra.mxu0 0
        %663 = vmatprep.subr.bf16.mxu0 0
        %664 = vmatpush1.bf16.msra.mxu0 0
        %665 = vmatprep.subr.bf16.mxu0 0
        %666 = vmatpush1.bf16.msra.mxu0 0
        %667 = vmatprep.subr.bf16.mxu0 0
        %668 = vmatpush1.bf16.msra.mxu0 0
        %669 = vmatprep.subr.bf16.mxu0 0
        %670 = vmatpush1.bf16.msra.mxu0 0
        %671 = vmatprep.subr.bf16.mxu0 0
        %672 = vmatpush1.bf16.msra.mxu0 0
        %673 = vmatprep.mubr.bf16.mxu0 0
        %674 = vmatmul.mubr.bf16.gmra.mrb[0].mxu0 %v639
        %v675 = vpop.f32.mrb[0].mxu0
        %v676 = vadd.f32 0.0, %v675
        %v677 = vpop.f32.mrb[0].mxu0
        %v678 = vpop.f32.mrb[0].mxu0
        %v679 = vadd.f32 0.0, %v678
        %v680 = vpop.f32.mrb[0].mxu0
        %681 = vdwg.mxu0
        %v684 = vunpack.c.l.b16 %v626
        %v685 = vunpack.c.l.b16 %v627
        %v686 = vpack.c.b16 %v685, %v684
        %v689 = vsel %vm369, %v624, 0
        %691 = vmatprep.subr.bf16.mxu0 0
        %692 = vmatpush1.bf16.msra.mxu0 %v686
        %693 = vmatprep.subr.bf16.mxu0 0
        %694 = vmatpush1.bf16.msra.mxu0 0
        %695 = vmatprep.subr.bf16.mxu0 0
        %696 = vmatpush1.bf16.msra.mxu0 0
        %697 = vmatprep.subr.bf16.mxu0 0
        %698 = vmatpush1.bf16.msra.mxu0 0
        %699 = vmatprep.subr.bf16.mxu0 0
        %700 = vmatpush1.bf16.msra.mxu0 0
        %701 = vmatprep.subr.bf16.mxu0 0
        %702 = vmatpush1.bf16.msra.mxu0 0
        %703 = vmatprep.subr.bf16.mxu0 0
        %704 = vmatpush1.bf16.msra.mxu0 0
        %705 = vmatprep.subr.bf16.mxu0 0
        %706 = vmatpush1.bf16.msra.mxu0 0
        %707 = vmatprep.subr.bf16.mxu0 0
        %708 = vmatpush1.bf16.msra.mxu0 0
        %709 = vmatprep.subr.bf16.mxu0 0
        %710 = vmatpush1.bf16.msra.mxu0 0
        %711 = vmatprep.subr.bf16.mxu0 0
        %712 = vmatpush1.bf16.msra.mxu0 0
        %713 = vmatprep.subr.bf16.mxu0 0
        %714 = vmatpush1.bf16.msra.mxu0 0
        %715 = vmatprep.subr.bf16.mxu0 0
        %716 = vmatpush1.bf16.msra.mxu0 0
        %717 = vmatprep.subr.bf16.mxu0 0
        %718 = vmatpush1.bf16.msra.mxu0 0
        %719 = vmatprep.subr.bf16.mxu0 0
        %720 = vmatpush1.bf16.msra.mxu0 0
        %721 = vmatprep.subr.bf16.mxu0 0
        %722 = vmatpush1.bf16.msra.mxu0 0
        %723 = vmatprep.mubr.bf16.mxu0 0
        %724 = vmatmul.mubr.bf16.gmra.mrb[0].mxu0 %v689
        %v725 = vpop.f32.mrb[0].mxu0
        %v726 = vadd.f32 %v676, %v725
        %v727 = vpop.f32.mrb[0].mxu0
        %v728 = vpop.f32.mrb[0].mxu0
        %v729 = vadd.f32 %v679, %v728
        %v730 = vpop.f32.mrb[0].mxu0
        %731 = vdwg.mxu0
        %v732 = vld [vmem:[#allocation2 + $0xa] sm:$0xff]
        %v733 = vld [vmem:[#allocation2 + $0x12] sm:$0xff]
        %v734 = vpack.c.bf16 %v733, %v732
        %s735 = scalar_lea.vmem [#allocation3], 40
        %v736 = vld [vmem:[%s735] sm:$0xf]
        %v737 = vld [vmem:[%s735 + $0x4] sm:$0xf]
        %v740 = vunpack.c.l.b16 %v736
        %v741 = vunpack.c.l.b16 %v737
        %v742 = vpack.c.b16 %v741, %v740
        %v745 = vsel %vm369, %v734, 0
        %747 = vmatprep.subr.bf16.mxu0 0
        %748 = vmatpush1.bf16.msra.mxu0 %v742
        %749 = vmatprep.subr.bf16.mxu0 0
        %750 = vmatpush1.bf16.msra.mxu0 0
        %751 = vmatprep.subr.bf16.mxu0 0
        %752 = vmatpush1.bf16.msra.mxu0 0
        %753 = vmatprep.subr.bf16.mxu0 0
        %754 = vmatpush1.bf16.msra.mxu0 0
        %755 = vmatprep.subr.bf16.mxu0 0
        %756 = vmatpush1.bf16.msra.mxu0 0
        %757 = vmatprep.subr.bf16.mxu0 0
        %758 = vmatpush1.bf16.msra.mxu0 0
        %759 = vmatprep.subr.bf16.mxu0 0
        %760 = vmatpush1.bf16.msra.mxu0 0
        %761 = vmatprep.subr.bf16.mxu0 0
        %762 = vmatpush1.bf16.msra.mxu0 0
        %763 = vmatprep.subr.bf16.mxu0 0
        %764 = vmatpush1.bf16.msra.mxu0 0
        %765 = vmatprep.subr.bf16.mxu0 0
        %766 = vmatpush1.bf16.msra.mxu0 0
        %767 = vmatprep.subr.bf16.mxu0 0
        %768 = vmatpush1.bf16.msra.mxu0 0
        %769 = vmatprep.subr.bf16.mxu0 0
        %770 = vmatpush1.bf16.msra.mxu0 0
        %771 = vmatprep.subr.bf16.mxu0 0
        %772 = vmatpush1.bf16.msra.mxu0 0
        %773 = vmatprep.subr.bf16.mxu0 0
        %774 = vmatpush1.bf16.msra.mxu0 0
        %775 = vmatprep.subr.bf16.mxu0 0
        %776 = vmatpush1.bf16.msra.mxu0 0
        %777 = vmatprep.subr.bf16.mxu0 0
        %778 = vmatpush1.bf16.msra.mxu0 0
        %779 = vmatprep.mubr.bf16.mxu0 0
        %780 = vmatmul.mubr.bf16.gmra.mrb[0].mxu0 %v745
        %v781 = vpop.f32.mrb[0].mxu0
        %v782 = vadd.f32 0.0, %v781
        %v783 = vpop.f32.mrb[0].mxu0
        %v784 = vpop.f32.mrb[0].mxu0
        %v785 = vadd.f32 0.0, %v784
        %v786 = vpop.f32.mrb[0].mxu0
        %787 = vdwg.mxu0
        %v788 = vadd.f32 %v726, %v782
        %v789 = vadd.f32 %v729, %v785
        %s790 = scalar_lea.vmem %s3, 1
        %v791 = vld [vmem:[%s790] sm:$0x1]
        %v793 = vlaneseq
        %v794 = vshrl.u32 %v793, 7
        %v795 = vsub.s32 0, %v794
        %v796 = vrot.slane %v791, %v795
        %v798 = vadd.f32 %v788, %v796
        %v799 = vadd.f32 %v789, %v796
        %v800 = vmax.f32 %v798, 0.0
        %v801 = vmax.f32 %v799, 0.0
        %v802 = vpack.c.bf16 %v801, %v800
        %s803 = scalar_lea.vmem [#allocation6], 8
        %v804 = vld [vmem:[%s803] sm:$0xf]
        %v805 = vld [vmem:[%s803 + $0x4] sm:$0xf]
        %s806 = scalar_lea.vmem %s5, 1
        %v807 = vld [vmem:[%s806] sm:$0x1]
        %v809 = vlaneseq
        %v810 = vshrl.u32 %v809, 7
        %v811 = vsub.s32 0, %v810
        %v812 = vrot.slane %v807, %v811
        %v816 = vunpack.c.l.b16 %v804
        %v817 = vunpack.c.l.b16 %v805
        %v818 = vpack.c.b16 %v817, %v816
        %v821 = vsel %vm369, %v802, 0
        %823 = vmatprep.subr.bf16.mxu0 0
        %824 = vmatpush1.bf16.msra.mxu0 %v818
        %825 = vmatprep.subr.bf16.mxu0 0
        %826 = vmatpush1.bf16.msra.mxu0 0
        %827 = vmatprep.subr.bf16.mxu0 0
        %828 = vmatpush1.bf16.msra.mxu0 0
        %829 = vmatprep.subr.bf16.mxu0 0
        %830 = vmatpush1.bf16.msra.mxu0 0
        %831 = vmatprep.subr.bf16.mxu0 0
        %832 = vmatpush1.bf16.msra.mxu0 0
        %833 = vmatprep.subr.bf16.mxu0 0
        %834 = vmatpush1.bf16.msra.mxu0 0
        %835 = vmatprep.subr.bf16.mxu0 0
        %836 = vmatpush1.bf16.msra.mxu0 0
        %837 = vmatprep.subr.bf16.mxu0 0
        %838 = vmatpush1.bf16.msra.mxu0 0
        %839 = vmatprep.subr.bf16.mxu0 0
        %840 = vmatpush1.bf16.msra.mxu0 0
        %841 = vmatprep.subr.bf16.mxu0 0
        %842 = vmatpush1.bf16.msra.mxu0 0
        %843 = vmatprep.subr.bf16.mxu0 0
        %844 = vmatpush1.bf16.msra.mxu0 0
        %845 = vmatprep.subr.bf16.mxu0 0
        %846 = vmatpush1.bf16.msra.mxu0 0
        %847 = vmatprep.subr.bf16.mxu0 0
        %848 = vmatpush1.bf16.msra.mxu0 0
        %849 = vmatprep.subr.bf16.mxu0 0
        %850 = vmatpush1.bf16.msra.mxu0 0
        %851 = vmatprep.subr.bf16.mxu0 0
        %852 = vmatpush1.bf16.msra.mxu0 0
        %853 = vmatprep.subr.bf16.mxu0 0
        %854 = vmatpush1.bf16.msra.mxu0 0
        %855 = vmatprep.mubr.bf16.mxu0 0
        %856 = vmatmul.mubr.bf16.gmra.mrb[0].mxu0 %v821
        %v857 = vpop.f32.mrb[0].mxu0
        %v858 = vadd.f32 %v812, %v857
        %v859 = vpop.f32.mrb[0].mxu0
        %v860 = vpop.f32.mrb[0].mxu0
        %v861 = vadd.f32 %v812, %v860
        %v862 = vpop.f32.mrb[0].mxu0
        %863 = vdwg.mxu0
        %v864 = vadd.f32 %v620, %v858
        %v865 = vadd.f32 %v621, %v861
        %v866 = vmul.f32 %v864, %v362
        %v867 = vmul.f32 %v865, %v367
        %868 = vst.msk [vmem:[#allocation2 + $0x8] sm:$0xff] %vm369, %v866
        %869 = vst.msk [vmem:[#allocation2 + $0x10] sm:$0xff] %vm369, %v867
        %v870 = vld [vmem:[#allocation2 + $0x8] sm:$0xff]
        %v871 = vld [vmem:[#allocation2 + $0x10] sm:$0xff]
        %v872 = vld [vmem:[#allocation2 + $0x4] sm:$0xff]
        %v873 = vld [vmem:[#allocation2 + $0xc] sm:$0xff]
        %v874 = vpack.c.bf16 %v873, %v872
        %s875 = scalar_lea.vmem [#allocation3], 48
        %v876 = vld [vmem:[%s875] sm:$0xf]
        %v877 = vld [vmem:[%s875 + $0x4] sm:$0xf]
        %v878 = vpack.c.bf16 %v871, %v870
        %s879 = scalar_lea.vmem [#allocation3], 56
        %v880 = vld [vmem:[%s879] sm:$0xf]
        %v881 = vld [vmem:[%s879 + $0x4] sm:$0xf]
        %v884 = vunpack.c.l.b16 %v880
        %v885 = vunpack.c.l.b16 %v881
        %v886 = vpack.c.b16 %v885, %v884
        %v889 = vsel %vm369, %v878, 0
        %891 = vmatprep.subr.bf16.mxu0 0
        %892 = vmatpush1.bf16.msra.mxu0 %v886
        %893 = vmatprep.subr.bf16.mxu0 0
        %894 = vmatpush1.bf16.msra.mxu0 0
        %895 = vmatprep.subr.bf16.mxu0 0
        %896 = vmatpush1.bf16.msra.mxu0 0
        %897 = vmatprep.subr.bf16.mxu0 0
        %898 = vmatpush1.bf16.msra.mxu0 0
        %899 = vmatprep.subr.bf16.mxu0 0
        %900 = vmatpush1.bf16.msra.mxu0 0
        %901 = vmatprep.subr.bf16.mxu0 0
        %902 = vmatpush1.bf16.msra.mxu0 0
        %903 = vmatprep.subr.bf16.mxu0 0
        %904 = vmatpush1.bf16.msra.mxu0 0
        %905 = vmatprep.subr.bf16.mxu0 0
        %906 = vmatpush1.bf16.msra.mxu0 0
        %907 = vmatprep.subr.bf16.mxu0 0
        %908 = vmatpush1.bf16.msra.mxu0 0
        %909 = vmatprep.subr.bf16.mxu0 0
        %910 = vmatpush1.bf16.msra.mxu0 0
        %911 = vmatprep.subr.bf16.mxu0 0
        %912 = vmatpush1.bf16.msra.mxu0 0
        %913 = vmatprep.subr.bf16.mxu0 0
        %914 = vmatpush1.bf16.msra.mxu0 0
        %915 = vmatprep.subr.bf16.mxu0 0
        %916 = vmatpush1.bf16.msra.mxu0 0
        %917 = vmatprep.subr.bf16.mxu0 0
        %918 = vmatpush1.bf16.msra.mxu0 0
        %919 = vmatprep.subr.bf16.mxu0 0
        %920 = vmatpush1.bf16.msra.mxu0 0
        %921 = vmatprep.subr.bf16.mxu0 0
        %922 = vmatpush1.bf16.msra.mxu0 0
        %923 = vmatprep.mubr.bf16.mxu0 0
        %924 = vmatmul.mubr.bf16.gmra.mrb[0].mxu0 %v889
        %v925 = vpop.f32.mrb[0].mxu0
        %v926 = vadd.f32 0.0, %v925
        %v927 = vpop.f32.mrb[0].mxu0
        %v928 = vpop.f32.mrb[0].mxu0
        %v929 = vadd.f32 0.0, %v928
        %v930 = vpop.f32.mrb[0].mxu0
        %931 = vdwg.mxu0
        %v934 = vunpack.c.l.b16 %v876
        %v935 = vunpack.c.l.b16 %v877
        %v936 = vpack.c.b16 %v935, %v934
        %v939 = vsel %vm369, %v874, 0
        %941 = vmatprep.subr.bf16.mxu0 0
        %942 = vmatpush1.bf16.msra.mxu0 %v936
        %943 = vmatprep.subr.bf16.mxu0 0
        %944 = vmatpush1.bf16.msra.mxu0 0
        %945 = vmatprep.subr.bf16.mxu0 0
        %946 = vmatpush1.bf16.msra.mxu0 0
        %947 = vmatprep.subr.bf16.mxu0 0
        %948 = vmatpush1.bf16.msra.mxu0 0
        %949 = vmatprep.subr.bf16.mxu0 0
        %950 = vmatpush1.bf16.msra.mxu0 0
        %951 = vmatprep.subr.bf16.mxu0 0
        %952 = vmatpush1.bf16.msra.mxu0 0
        %953 = vmatprep.subr.bf16.mxu0 0
        %954 = vmatpush1.bf16.msra.mxu0 0
        %955 = vmatprep.subr.bf16.mxu0 0
        %956 = vmatpush1.bf16.msra.mxu0 0
        %957 = vmatprep.subr.bf16.mxu0 0
        %958 = vmatpush1.bf16.msra.mxu0 0
        %959 = vmatprep.subr.bf16.mxu0 0
        %960 = vmatpush1.bf16.msra.mxu0 0
        %961 = vmatprep.subr.bf16.mxu0 0
        %962 = vmatpush1.bf16.msra.mxu0 0
        %963 = vmatprep.subr.bf16.mxu0 0
        %964 = vmatpush1.bf16.msra.mxu0 0
        %965 = vmatprep.subr.bf16.mxu0 0
        %966 = vmatpush1.bf16.msra.mxu0 0
        %967 = vmatprep.subr.bf16.mxu0 0
        %968 = vmatpush1.bf16.msra.mxu0 0
        %969 = vmatprep.subr.bf16.mxu0 0
        %970 = vmatpush1.bf16.msra.mxu0 0
        %971 = vmatprep.subr.bf16.mxu0 0
        %972 = vmatpush1.bf16.msra.mxu0 0
        %973 = vmatprep.mubr.bf16.mxu0 0
        %974 = vmatmul.mubr.bf16.gmra.mrb[0].mxu0 %v939
        %v975 = vpop.f32.mrb[0].mxu0
        %v976 = vadd.f32 %v926, %v975
        %v977 = vpop.f32.mrb[0].mxu0
        %v978 = vpop.f32.mrb[0].mxu0
        %v979 = vadd.f32 %v929, %v978
        %v980 = vpop.f32.mrb[0].mxu0
        %981 = vdwg.mxu0
        %v982 = vld [vmem:[#allocation2 + $0xc] sm:$0xff]
        %v983 = vld [vmem:[#allocation2 + $0x14] sm:$0xff]
        %v984 = vpack.c.bf16 %v983, %v982
        %s985 = scalar_lea.vmem [#allocation3], 64
        %v986 = vld [vmem:[%s985] sm:$0xf]
        %v987 = vld [vmem:[%s985 + $0x4] sm:$0xf]
        %v990 = vunpack.c.l.b16 %v986
        %v991 = vunpack.c.l.b16 %v987
        %v992 = vpack.c.b16 %v991, %v990
        %v995 = vsel %vm369, %v984, 0
        %997 = vmatprep.subr.bf16.mxu0 0
        %998 = vmatpush1.bf16.msra.mxu0 %v992
        %999 = vmatprep.subr.bf16.mxu0 0
        %1000 = vmatpush1.bf16.msra.mxu0 0
        %1001 = vmatprep.subr.bf16.mxu0 0
        %1002 = vmatpush1.bf16.msra.mxu0 0
        %1003 = vmatprep.subr.bf16.mxu0 0
        %1004 = vmatpush1.bf16.msra.mxu0 0
        %1005 = vmatprep.subr.bf16.mxu0 0
        %1006 = vmatpush1.bf16.msra.mxu0 0
        %1007 = vmatprep.subr.bf16.mxu0 0
        %1008 = vmatpush1.bf16.msra.mxu0 0
        %1009 = vmatprep.subr.bf16.mxu0 0
        %1010 = vmatpush1.bf16.msra.mxu0 0
        %1011 = vmatprep.subr.bf16.mxu0 0
        %1012 = vmatpush1.bf16.msra.mxu0 0
        %1013 = vmatprep.subr.bf16.mxu0 0
        %1014 = vmatpush1.bf16.msra.mxu0 0
        %1015 = vmatprep.subr.bf16.mxu0 0
        %1016 = vmatpush1.bf16.msra.mxu0 0
        %1017 = vmatprep.subr.bf16.mxu0 0
        %1018 = vmatpush1.bf16.msra.mxu0 0
        %1019 = vmatprep.subr.bf16.mxu0 0
        %1020 = vmatpush1.bf16.msra.mxu0 0
        %1021 = vmatprep.subr.bf16.mxu0 0
        %1022 = vmatpush1.bf16.msra.mxu0 0
        %1023 = vmatprep.subr.bf16.mxu0 0
        %1024 = vmatpush1.bf16.msra.mxu0 0
        %1025 = vmatprep.subr.bf16.mxu0 0
        %1026 = vmatpush1.bf16.msra.mxu0 0
        %1027 = vmatprep.subr.bf16.mxu0 0
        %1028 = vmatpush1.bf16.msra.mxu0 0
        %1029 = vmatprep.mubr.bf16.mxu0 0
        %1030 = vmatmul.mubr.bf16.gmra.mrb[0].mxu0 %v995
        %v1031 = vpop.f32.mrb[0].mxu0
        %v1032 = vadd.f32 0.0, %v1031
        %v1033 = vpop.f32.mrb[0].mxu0
        %v1034 = vpop.f32.mrb[0].mxu0
        %v1035 = vadd.f32 0.0, %v1034
        %v1036 = vpop.f32.mrb[0].mxu0
        %1037 = vdwg.mxu0
        %v1038 = vadd.f32 %v976, %v1032
        %v1039 = vadd.f32 %v979, %v1035
        %s1040 = scalar_lea.vmem %s3, 2
        %v1041 = vld [vmem:[%s1040] sm:$0x1]
        %v1043 = vlaneseq
        %v1044 = vshrl.u32 %v1043, 7
        %v1045 = vsub.s32 0, %v1044
        %v1046 = vrot.slane %v1041, %v1045
        %v1048 = vadd.f32 %v1038, %v1046
        %v1049 = vadd.f32 %v1039, %v1046
        %v1050 = vmax.f32 %v1048, 0.0
        %v1051 = vmax.f32 %v1049, 0.0
        %v1052 = vpack.c.bf16 %v1051, %v1050
        %s1053 = scalar_lea.vmem [#allocation6], 16
        %v1054 = vld [vmem:[%s1053] sm:$0xf]
        %v1055 = vld [vmem:[%s1053 + $0x4] sm:$0xf]
        %s1056 = scalar_lea.vmem %s5, 2
        %v1057 = vld [vmem:[%s1056] sm:$0x1]
        %v1059 = vlaneseq
        %v1060 = vshrl.u32 %v1059, 7
        %v1061 = vsub.s32 0, %v1060
        %v1062 = vrot.slane %v1057, %v1061
        %v1066 = vunpack.c.l.b16 %v1054
        %v1067 = vunpack.c.l.b16 %v1055
        %v1068 = vpack.c.b16 %v1067, %v1066
        %v1071 = vsel %vm369, %v1052, 0
        %1073 = vmatprep.subr.bf16.mxu0 0
        %1074 = vmatpush1.bf16.msra.mxu0 %v1068
        %1075 = vmatprep.subr.bf16.mxu0 0
        %1076 = vmatpush1.bf16.msra.mxu0 0
        %1077 = vmatprep.subr.bf16.mxu0 0
        %1078 = vmatpush1.bf16.msra.mxu0 0
        %1079 = vmatprep.subr.bf16.mxu0 0
        %1080 = vmatpush1.bf16.msra.mxu0 0
        %1081 = vmatprep.subr.bf16.mxu0 0
        %1082 = vmatpush1.bf16.msra.mxu0 0
        %1083 = vmatprep.subr.bf16.mxu0 0
        %1084 = vmatpush1.bf16.msra.mxu0 0
        %1085 = vmatprep.subr.bf16.mxu0 0
        %1086 = vmatpush1.bf16.msra.mxu0 0
        %1087 = vmatprep.subr.bf16.mxu0 0
        %1088 = vmatpush1.bf16.msra.mxu0 0
        %1089 = vmatprep.subr.bf16.mxu0 0
        %1090 = vmatpush1.bf16.msra.mxu0 0
        %1091 = vmatprep.subr.bf16.mxu0 0
        %1092 = vmatpush1.bf16.msra.mxu0 0
        %1093 = vmatprep.subr.bf16.mxu0 0
        %1094 = vmatpush1.bf16.msra.mxu0 0
        %1095 = vmatprep.subr.bf16.mxu0 0
        %1096 = vmatpush1.bf16.msra.mxu0 0
        %1097 = vmatprep.subr.bf16.mxu0 0
        %1098 = vmatpush1.bf16.msra.mxu0 0
        %1099 = vmatprep.subr.bf16.mxu0 0
        %1100 = vmatpush1.bf16.msra.mxu0 0
        %1101 = vmatprep.subr.bf16.mxu0 0
        %1102 = vmatpush1.bf16.msra.mxu0 0
        %1103 = vmatprep.subr.bf16.mxu0 0
        %1104 = vmatpush1.bf16.msra.mxu0 0
        %1105 = vmatprep.mubr.bf16.mxu0 0
        %1106 = vmatmul.mubr.bf16.gmra.mrb[0].mxu0 %v1071
        %v1107 = vpop.f32.mrb[0].mxu0
        %v1108 = vadd.f32 %v1062, %v1107
        %v1109 = vpop.f32.mrb[0].mxu0
        %v1110 = vpop.f32.mrb[0].mxu0
        %v1111 = vadd.f32 %v1062, %v1110
        %v1112 = vpop.f32.mrb[0].mxu0
        %1113 = vdwg.mxu0
        %v1114 = vadd.f32 %v870, %v1108
        %v1115 = vadd.f32 %v871, %v1111
        %v1116 = vmul.f32 %v1114, %v362
        %v1117 = vmul.f32 %v1115, %v367
        %1118 = vst.msk [vmem:[#allocation2 + $0x8] sm:$0xff] %vm369, %v1116
        %1119 = vst.msk [vmem:[#allocation2 + $0x10] sm:$0xff] %vm369, %v1117
        %v1120 = vld [vmem:[#allocation2 + $0x8] sm:$0xff]
        %v1121 = vld [vmem:[#allocation2 + $0x10] sm:$0xff]
        %v1122 = vpack.c.bf16 %v1121, %v1120
        %v1123 = vld [vmem:[%s6] sm:$0xf]
        %v1124 = vld [vmem:[%s6 + $0x4] sm:$0xf]
        %v1125 = vld [vmem:[%s7] sm:$0x1]
        %v1127 = vlaneseq
        %v1128 = vshrl.u32 %v1127, 7
        %v1129 = vsub.s32 0, %v1128
        %v1130 = vrot.slane %v1125, %v1129
        %v1134 = vunpack.c.l.b16 %v1123
        %v1135 = vunpack.c.l.b16 %v1124
        %v1136 = vpack.c.b16 %v1135, %v1134
        %v1139 = vsel %vm369, %v1122, 0
        %1141 = vmatprep.subr.bf16.mxu0 0
        %1142 = vmatpush1.bf16.msra.mxu0 %v1136
        %1143 = vmatprep.subr.bf16.mxu0 0
        %1144 = vmatpush1.bf16.msra.mxu0 0
        %1145 = vmatprep.subr.bf16.mxu0 0
        %1146 = vmatpush1.bf16.msra.mxu0 0
        %1147 = vmatprep.subr.bf16.mxu0 0
        %1148 = vmatpush1.bf16.msra.mxu0 0
        %1149 = vmatprep.subr.bf16.mxu0 0
        %1150 = vmatpush1.bf16.msra.mxu0 0
        %1151 = vmatprep.subr.bf16.mxu0 0
        %1152 = vmatpush1.bf16.msra.mxu0 0
        %1153 = vmatprep.subr.bf16.mxu0 0
        %1154 = vmatpush1.bf16.msra.mxu0 0
        %1155 = vmatprep.subr.bf16.mxu0 0
        %1156 = vmatpush1.bf16.msra.mxu0 0
        %1157 = vmatprep.subr.bf16.mxu0 0
        %1158 = vmatpush1.bf16.msra.mxu0 0
        %1159 = vmatprep.subr.bf16.mxu0 0
        %1160 = vmatpush1.bf16.msra.mxu0 0
        %1161 = vmatprep.subr.bf16.mxu0 0
        %1162 = vmatpush1.bf16.msra.mxu0 0
        %1163 = vmatprep.subr.bf16.mxu0 0
        %1164 = vmatpush1.bf16.msra.mxu0 0
        %1165 = vmatprep.subr.bf16.mxu0 0
        %1166 = vmatpush1.bf16.msra.mxu0 0
        %1167 = vmatprep.subr.bf16.mxu0 0
        %1168 = vmatpush1.bf16.msra.mxu0 0
        %1169 = vmatprep.subr.bf16.mxu0 0
        %1170 = vmatpush1.bf16.msra.mxu0 0
        %1171 = vmatprep.subr.bf16.mxu0 0
        %1172 = vmatpush1.bf16.msra.mxu0 0
        %1173 = vmatprep.mubr.bf16.mxu0 0
        %1174 = vmatmul.mubr.bf16.gmra.mrb[0].mxu0 %v1139
        %v1175 = vpop.f32.mrb[0].mxu0
        %v1176 = vadd.f32 %v1130, %v1175
        %v1177 = vpop.f32.mrb[0].mxu0
        %v1178 = vpop.f32.mrb[0].mxu0
        %v1179 = vadd.f32 %v1130, %v1178
        %v1180 = vpop.f32.mrb[0].mxu0
        %1181 = vdwg.mxu0
        %v1182 = vmul.f32 %v1176, %v362
        %v1183 = vmul.f32 %v1179, %v367
        %v1184 = vpack.c.bf16 %v1183, %v1182
        %v1186 = vunpack.c.l.b16 %v1184
        %v1187 = vunpack.c.h.b16 %v1184
        %v1188 = vpack.c.b16 %v1186, %v1186
        %v1189 = vpack.c.b16 %v1187, %v1187
        %1192 = vst [vmem:[%s343] sm:$0xf] %v1188
        %1193 = vst [vmem:[%s343 + $0x4] sm:$0xf] %v1189
        %s1194 = sand.u32 %s210, 1
        %s1195 = scalar_lea.sflag [#allocation5], %s1194
        %s1196 = sand.u32 %s210, 1
        %s1197 = smul.addr %s1196, 8
        %s1198 = scalar_lea.vmem [#allocation8], %s1197
        // Predicated region
        $region61: #{tpu_custom_call.1} parent=51 // pred_check
          %p1199 = pneg %p220
        $region62: #{tpu_custom_call.1} parent=51 // pred_check_branch
          %1201 = sbr.rel (%p1199) target = $region64
        $region63: #{tpu_custom_call.1} parent=51 // pred_region
          %s1203 = ssub.s32 128, 128
          %1204 = vsyncadd %s1195, %s1203
          %s1205 = smul.addr %s24, 2
          %s1206 = smul.addr %s1205, 64
          %s1207 = scalar_lea.hbm %s8, %s1206
          %s1208 = sshll.u32 %s1198, 4
          %s1209 = int_to_ptr.vmem [resolvable:$true] %s1208
          %1214 = dma.vmem_to_hbm [thread:$0]  %s1209, 128, %s1207, %s1195, 64, 64, 4
        $region64: #{tpu_custom_call.1} parent=51 // pred_fallthru
          _
      $region52: #{tpu_custom_call.1} parent=5 // pred_fallthru
        _
      %p1215 = scmp.le.s32.totalorder 2, %s19
      // Predicated region
      $region65: #{tpu_custom_call.1} parent=5 // pred_check
        %p1216 = pneg %p1215
      $region66: #{tpu_custom_call.1} parent=5 // pred_check_branch
        %1218 = sbr.rel (%p1216) target = $region68
      $region67: #{tpu_custom_call.1} parent=5 // pred_region
        %s1219 = ssub.s32 %s19, 2
        // Predicated region
        $region69: #{tpu_custom_call.1} parent=67 // pred_check
          %p1220 = pneg %p226
        $region70: #{tpu_custom_call.1} parent=67 // pred_check_branch
          %1222 = sbr.rel (%p1220) target = $region72
        $region71: #{tpu_custom_call.1} parent=67 // pred_region
          %s1223 = sand.u32 %s211, 1
          %s1224 = scalar_lea.sflag [#allocation5], %s1223
          %s1225 = sand.u32 %s211, 1
          %s1226 = smul.addr %s1225, 8
          %s1227 = scalar_lea.vmem [#allocation8], %s1226
          %1228 = dma.done %s1224, 128
        $region72: #{tpu_custom_call.1} parent=67 // pred_fallthru
          _
      $region68: #{tpu_custom_call.1} parent=5 // pred_fallthru
        _
    $region6: #{tpu_custom_call.1} parent=1 // loop_footer
      %s23 = sadd.s32 1, %s19
    $region7: #{tpu_custom_call.1} parent=1 // loop_footer_branch
      %18 = sbr.rel target = $region3
    $region8: #{tpu_custom_call.1} parent=1 // loop_exit
      _
    %1229 = vsyncpa [#allocation4], 1
    %s1230 = scalar_lea.sflag [#allocation4], 1
    %1231 = vsyncpa %s1230, 1
    %1232 = vsyncpa [#allocation7], 1
    %1233 = vsyncpa [#allocation5], 1
    %s1234 = scalar_lea.sflag [#allocation5], 1
    %1235 = vsyncpa %s1234, 1

</llo_original>
